<compile_context>
chip_gen: v6e
topology: v6e:2x2x1
jax: 0.10.0
libtpu: 0.0.40
codegen_flags: <defaults>
</compile_context>

<pallas_src>
import functools
import math

import jax
import jax.numpy as jnp
from jax import lax
from jax.experimental import pallas as pl
from jax.experimental.pallas import tpu as pltpu

# ----------------------------- configuration (small test shapes) -----------------------------
D_INPUT = 12          # from the script: d_input = 12
D_OUTPUT = 6          # from the script: d_output = 6
D_MODEL = 128         # d_model (default 256; use a small lane-aligned value)
N_LAYERS = 2          # args.n_layers (synthetic choice)
D_STATE = 64          # S4D default d_state
B = 2                 # batch
L = 16                # sequence length


# ----------------------------- in-kernel math helpers -----------------------------
def _erf(x):
    # Abramowitz & Stegun 7.1.26 polynomial approximation (|err| <= 1.5e-7).
    # Reproduces torch.nn.GELU (exact / erf-based); the divide is an approx EUP reciprocal.
    a1, a2, a3, a4, a5 = 0.254829592, -0.284496736, 1.421413741, -1.453152027, 1.061405429
    p = 0.3275911
    s = jnp.where(x >= 0.0, 1.0, -1.0)
    ax = jnp.abs(x)
    t = pl.reciprocal(1.0 + p * ax, approx=True)          # EUP slot, not a VALU divide chain
    poly = ((((a5 * t + a4) * t + a3) * t + a2) * t + a1) * t
    return s * (1.0 - poly * jnp.exp(-ax * ax))


def _gelu_exact(x):
    return 0.5 * x * (1.0 + _erf(x * 0.7071067811865476))


# ----------------------------- fused Pallas kernel -----------------------------
def fused_s4_kernel(x_ref, ew_ref, eb_ref, kt_ref, d_ref, wc_ref, bc_ref, g_ref, be_ref,
                    out_ref, h_ref, *, n_batch, seq_len):
    """Grid = (layer,).  Whole batch lives in the block.
       layer == 0 : h = encoder(x)                             (written to (B*L, H) VMEM scratch)
       every layer: h = LayerNorm(GLU(Conv1x1(GELU(conv(h,K) + h*D))) + h)
       last layer : out = mean_L(h)                            (one dense (B, H) store to HBM)
    """
    layer = pl.program_id(0)

    # ---- encoder (only on the first layer iteration) ----
    @pl.when(layer == 0)
    def _():
        h_ref[...] = (
            jnp.dot(x_ref[...], ew_ref[...], preferred_element_type=jnp.float32)
            + eb_ref[...]
        )

    u = h_ref[...]                                   # (B*L, H) f32
    BL, Hd = u.shape
    kt = kt_ref[0]                                   # (L, H): kt[t, h] = K[h, t]

    # ---- causal depthwise SSM conv over L via XLU roll + VPU select (no unaligned slices) ----
    # y[b, l, h] = sum_{t<=l} u[b, l - t, h] * K[h, t]
    row = lax.broadcasted_iota(jnp.int32, (BL, 1), 0) % seq_len   # position within each sequence
    y = u * kt[0:1, :]                                            # t = 0 term (no shift / mask)
    for t in range(1, seq_len):                                   # static, unrolled (L small)
        shifted = pltpu.roll(u, shift=t, axis=0)                  # row r <- row r - t (circular)
        y = y + jnp.where(row >= t, shifted, 0.0) * kt[t:t + 1, :]

    # ---- D skip + exact GELU ----
    y = y + u * d_ref[0]                                          # (1, H) broadcast
    y = _gelu_exact(y)

    # ---- 1x1 conv (channel mixing on the MXU, bf16 operands / f32 accumulate) + GLU ----
    h2 = (
        jnp.dot(y.astype(jnp.bfloat16), wc_ref[0], preferred_element_type=jnp.float32)
        + bc_ref[0]
    )                                                             # (B*L, 2H) f32
    z = h2[:, :Hd] * jax.nn.sigmoid(h2[:, Hd:])                   # GLU over channel halves

    # ---- residual + post LayerNorm over d_model ----
    xr = z + u
    mu = jnp.mean(xr, axis=-1, keepdims=True)
    var = jnp.mean((xr - mu) ** 2, axis=-1, keepdims=True)
    xn = (xr - mu) * lax.rsqrt(var + 1e-5)
    h_new = xn * g_ref[0] + be_ref[0]
    h_ref[...] = h_new

    # ---- sequence mean-pool, written once as a dense (B, H) slab ----
    @pl.when(layer == pl.num_programs(0) - 1)
    def _():
        out_ref[...] = jnp.mean(h_new.reshape(n_batch, seq_len, Hd), axis=1)


def fused_s4_pallas(x, prep):
    B_, L_, Din = x.shape
    n_layers, Lk, H = prep["kt"].shape
    assert L_ == Lk, "sequence length must match the precomputed SSM kernel (no L padding)"
    Dpad = prep["enc_w"].shape[0]
    H2 = 2 * H

    # pad the ragged input-feature dim to the sublane multiple used by enc_w (zeros are inert)
    x_pad = jnp.pad(x, ((0, 0), (0, 0), (0, Dpad - Din)))
    x_flat = x_pad.reshape(B_ * L_, Dpad)

    kernel = functools.partial(fused_s4_kernel, n_batch=B_, seq_len=L_)

    return pl.pallas_call(
        kernel,
        out_shape=jax.ShapeDtypeStruct((B_, H), jnp.float32),
        grid_spec=pltpu.PrefetchScalarGridSpec(
            num_scalar_prefetch=0,
            grid=(n_layers,),
            in_specs=[
                pl.BlockSpec((B_ * L_, Dpad), lambda l: (0, 0)),      # x (flattened, padded)
                pl.BlockSpec((Dpad, H), lambda l: (0, 0)),            # enc_w
                pl.BlockSpec((1, H), lambda l: (0, 0)),               # enc_b
                pl.BlockSpec((1, L_, H), lambda l: (l, 0, 0)),        # K^T (per layer)
                pl.BlockSpec((1, 1, H), lambda l: (l, 0, 0)),         # D   (per layer)
                pl.BlockSpec((1, H, H2), lambda l: (l, 0, 0)),        # wc  (per layer, bf16)
                pl.BlockSpec((1, 1, H2), lambda l: (l, 0, 0)),        # bc  (per layer)
                pl.BlockSpec((1, 1, H), lambda l: (l, 0, 0)),         # ln_g
                pl.BlockSpec((1, 1, H), lambda l: (l, 0, 0)),         # ln_b
            ],
            out_specs=pl.BlockSpec((B_, H), lambda l: (0, 0)),
            scratch_shapes=[pltpu.VMEM((B_ * L_, H), jnp.float32)],   # persistent activation h
        ),
        compiler_params=pltpu.CompilerParams(
            dimension_semantics=("arbitrary",)),                      # layer axis carries state
    )(x_flat, prep["enc_w"], prep["enc_b"], prep["kt"], prep["D"],
      prep["wc"], prep["bc"], prep["ln_g"], prep["ln_b"])


# ----------------------------- parameter-only precompute (hoisted out of forward) -----------------------------
def ssm_kernel_K(lp, L_):
    """S4DKernel.forward(L): Vandermonde kernel K of shape (H, L).  Parameter-derived only."""
    dt = jnp.exp(lp["log_dt"])                                   # (H,)
    A = -jnp.exp(lp["log_A_real"]) + 1j * lp["A_imag"]           # (H, N/2)
    C = lp["C_re"] + 1j * lp["C_im"]                             # (H, N/2)
    dtA = A * dt[:, None]
    Ck = C * (jnp.exp(dtA) - 1.0) / A
    exps = jnp.exp(dtA[:, :, None] * jnp.arange(L_, dtype=jnp.float32)[None, None, :])
    K = 2.0 * jnp.real(jnp.einsum("hn,hnl->hl", Ck, exps))
    return K.astype(jnp.float32)                                 # (H, L)


def prepare_inference_params(params, L_):
    """Precompute everything that does not depend on the input: SSM kernels (transposed to
    (L, H)), layer-stacked params, zero-padded enc_w, bf16 MXU weights.  Done ONCE."""
    layers = params["layers"]
    kt = jnp.stack([ssm_kernel_K(lp, L_).T for lp in layers], axis=0)          # (n, L, H) f32
    din = params["enc_w"].shape[0]
    din_pad = ((din + 7) // 8) * 8                                             # 12 -> 16
    enc_w = jnp.pad(params["enc_w"], ((0, din_pad - din), (0, 0)))             # (16, H)
    return dict(
        enc_w=enc_w,
        enc_b=params["enc_b"],                                                  # (1, H)
        kt=kt,
        D=jnp.stack([lp["D"] for lp in layers], axis=0),                        # (n, 1, H)
        wc=jnp.stack([lp["wc"] for lp in layers], axis=0).astype(jnp.bfloat16), # (n, H, 2H)
        bc=jnp.stack([lp["bc"] for lp in layers], axis=0),                      # (n, 1, 2H)
        ln_g=jnp.stack([lp["ln_g"] for lp in layers], axis=0),                  # (n, 1, H)
        ln_b=jnp.stack([lp["ln_b"] for lp in layers], axis=0),                  # (n, 1, H)
        decoder=params["decoder"],
    )


# ----------------------------- CfC / AutoNCP decoder (plain JAX glue) -----------------------------
# TODO(synk): the ncps CfC decoder with AutoNCP(20, 6) wiring is a tiny sequential wired RNN
# (20 units, B steps); it is implemented faithfully in plain JAX (lax.scan) rather than as a
# Pallas kernel — it is not a vector hot path.
def cfc_decoder(x_mean, dec_params):
    # x_mean: (B, d_model).  ncps CfC treats a 2-D input as UN-batched: it unsqueezes a batch
    # dim of 1 and runs the recurrence over the B rows as a length-B "sequence" (quirk of the
    # reference model: x.mean(dim=1) produces a 2-D tensor).  Hidden state: 20 units split
    # into [9 inter, 5 command, 6 motor] layers; per-layer CfC cell in "default" mode.
    def cell(x_in, h, p):
        cat = jnp.concatenate([x_in, h], axis=0)
        ff1 = jnp.tanh(cat @ (p["w_ff1"] * p["mask"]) + p["b_ff1"])
        ff2 = jnp.tanh(cat @ (p["w_ff2"] * p["mask"]) + p["b_ff2"])
        t_a = cat @ p["w_ta"] + p["b_ta"]
        t_b = cat @ p["w_tb"] + p["b_tb"]
        t_interp = jax.nn.sigmoid(t_a * 1.0 + t_b)   # timespans default to 1.0
        return ff1 * (1.0 - t_interp) + t_interp * ff2

    def step(h, x_t):
        h0, h1, h2 = h[:9], h[9:14], h[14:]
        n0 = cell(x_t, h0, dec_params[0])
        n1 = cell(n0, h1, dec_params[1])
        n2 = cell(n1, h2, dec_params[2])
        return jnp.concatenate([n0, n1, n2]), n2      # motor layer is the readout

    _, outs = jax.lax.scan(step, jnp.zeros((20,), jnp.float32), x_mean)
    return outs                                       # (B, D_OUTPUT)


# ----------------------------- full forward -----------------------------
def s4_model_forward(prep, x):
    # x: (B, L, D_INPUT)
    pooled = fused_s4_pallas(x, prep)                 # (B, H)  == x.mean(dim=1) after all layers
    return cfc_decoder(pooled, prep["decoder"])       # (B, D_OUTPUT)


# ----------------------------- deterministic synthetic parameters -----------------------------
def init_params(key):
    keys = jax.random.split(key, 128)
    it = iter(keys)
    nk = lambda: next(it)
    H, N2 = D_MODEL, D_STATE // 2

    params = {
        "enc_w": jax.random.normal(nk(), (D_INPUT, H), jnp.float32) / math.sqrt(D_INPUT),
        "enc_b": 0.01 * jax.random.normal(nk(), (1, H), jnp.float32),
    }

    layers = []
    for _ in range(N_LAYERS):
        log_dt = (
            jax.random.uniform(nk(), (H,), jnp.float32)
            * (math.log(0.1) - math.log(0.001))
            + math.log(0.001)
        )
        layers.append(
            dict(
                log_dt=log_dt,
                C_re=jax.random.normal(nk(), (H, N2), jnp.float32) * (0.5 ** 0.5),
                C_im=jax.random.normal(nk(), (H, N2), jnp.float32) * (0.5 ** 0.5),
                log_A_real=jnp.log(0.5 * jnp.ones((H, N2), jnp.float32)),
                A_imag=math.pi * jnp.tile(jnp.arange(N2, dtype=jnp.float32), (H, 1)),
                D=jax.random.normal(nk(), (1, H), jnp.float32),
                wc=jax.random.normal(nk(), (H, 2 * H), jnp.float32) / math.sqrt(H),
                bc=0.01 * jax.random.normal(nk(), (1, 2 * H), jnp.float32),
                ln_g=jnp.ones((1, H), jnp.float32),
                ln_b=jnp.zeros((1, H), jnp.float32),
            )
        )
    params["layers"] = layers

    # AutoNCP(20, 6): 9 inter, 5 command, 6 motor neurons; per-layer sparse CfC cells.
    inter, command, motor = 9, 5, 6
    in_sizes = [D_MODEL, inter, command]
    hid_sizes = [inter, command, motor]
    dec = []
    for i in range(3):
        cat, k = in_sizes[i] + hid_sizes[i], hid_sizes[i]
        mask_in = (jax.random.uniform(nk(), (in_sizes[i], k)) < 0.6).astype(jnp.float32)
        mask = jnp.concatenate([mask_in, jnp.ones((hid_sizes[i], k), jnp.float32)], axis=0)
        lin = lambda fi, fo: jax.random.normal(nk(), (fi, fo), jnp.float32) / math.sqrt(fi)
        dec.append(
            dict(
                w_ff1=lin(cat, k), b_ff1=0.01 * jax.random.normal(nk(), (k,), jnp.float32),
                w_ff2=lin(cat, k), b_ff2=0.01 * jax.random.normal(nk(), (k,), jnp.float32),
                w_ta=lin(cat, k), b_ta=0.01 * jax.random.normal(nk(), (k,), jnp.float32),
                w_tb=lin(cat, k), b_tb=0.01 * jax.random.normal(nk(), (k,), jnp.float32),
                mask=mask,
            )
        )
    params["decoder"] = dec
    return params


if __name__ == "__main__":
    root = jax.random.PRNGKey(0)
    k_params, k_x = jax.random.split(root)
    params = init_params(k_params)
    prep = prepare_inference_params(params, L)         # one-time, parameter-only precompute
    x = jax.random.normal(k_x, (B, L, D_INPUT), jnp.float32)

    fwd = jax.jit(s4_model_forward)
    out = fwd(prep, x)
    out = jax.block_until_ready(out)

    assert out.shape == (B, D_OUTPUT), out.shape
    assert bool(jnp.all(jnp.isfinite(out)))
    print("KERNEL_OK")
</pallas_src>

<mosaic_0001>
module attributes {stable_mosaic.version = 11 : i64} {
  func.func @fused_s4_kernel(%arg0: i32, %arg1: memref<32x16xf32, #tpu.memory_space<vmem>>, %arg2: memref<16x128xf32, #tpu.memory_space<vmem>>, %arg3: memref<1x128xf32, #tpu.memory_space<vmem>>, %arg4: memref<1x16x128xf32, #tpu.memory_space<vmem>>, %arg5: memref<1x1x128xf32, #tpu.memory_space<vmem>>, %arg6: memref<1x128x256xbf16, #tpu.memory_space<vmem>>, %arg7: memref<1x1x256xf32, #tpu.memory_space<vmem>>, %arg8: memref<1x1x128xf32, #tpu.memory_space<vmem>>, %arg9: memref<1x1x128xf32, #tpu.memory_space<vmem>>, %arg10: memref<2x128xf32, #tpu.memory_space<vmem>>, %arg11: memref<32x128xf32, #tpu.memory_space<vmem>>) attributes {dimension_semantics = [#tpu.dimension_semantics<arbitrary>], iteration_bounds = array<i64: 2>, scalar_prefetch = 0 : i64, scratch_operands = 1 : i64, tpu.core_type = #tpu.core_type<tc>, window_params = [{pipeline_mode = #tpu.pipeline_mode<synchronous>, transform_indices = @transform_0, window_bounds = array<i64: 32, 16>}, {pipeline_mode = #tpu.pipeline_mode<synchronous>, transform_indices = @transform_1, window_bounds = array<i64: 16, 128>}, {pipeline_mode = #tpu.pipeline_mode<synchronous>, transform_indices = @transform_2, window_bounds = array<i64: 1, 128>}, {transform_indices = @transform_3, window_bounds = array<i64: 1, 16, 128>}, {transform_indices = @transform_4, window_bounds = array<i64: 1, 1, 128>}, {transform_indices = @transform_5, window_bounds = array<i64: 1, 128, 256>}, {transform_indices = @transform_6, window_bounds = array<i64: 1, 1, 256>}, {transform_indices = @transform_7, window_bounds = array<i64: 1, 1, 128>}, {transform_indices = @transform_8, window_bounds = array<i64: 1, 1, 128>}, {pipeline_mode = #tpu.pipeline_mode<synchronous>, transform_indices = @transform_9, window_bounds = array<i64: 2, 128>}]} {
    %c0_i32 = arith.constant 0 : i32
    %0 = arith.cmpi eq, %arg0, %c0_i32 : i32
    %1 = arith.extui %0 : i1 to i32
    %c0_i32_0 = arith.constant 0 : i32
    %2 = arith.cmpi ne, %1, %c0_i32_0 : i32
    scf.if %2 {
      %c0_80 = arith.constant 0 : index
      %c0_81 = arith.constant 0 : index
      %283 = vector.load %arg1[%c0_80, %c0_81] : memref<32x16xf32, #tpu.memory_space<vmem>>, vector<32x16xf32>
      %c0_82 = arith.constant 0 : index
      %c0_83 = arith.constant 0 : index
      %284 = vector.load %arg2[%c0_82, %c0_83] : memref<16x128xf32, #tpu.memory_space<vmem>>, vector<16x128xf32>
      %cst_84 = arith.constant dense<0.000000e+00> : vector<32x128xf32>
      %285 = tpu.matmul %283, %284, %cst_84 {dimension_numbers = #tpu.dot_dimension_numbers<[1], [0], [0], [1], [0, 0, 1, 1], [], []>} : vector<32x16xf32>, vector<16x128xf32>, vector<32x128xf32> -> vector<32x128xf32>
      %c0_85 = arith.constant 0 : index
      %c0_86 = arith.constant 0 : index
      %286 = vector.load %arg3[%c0_85, %c0_86] : memref<1x128xf32, #tpu.memory_space<vmem>>, vector<1x128xf32>
      %287 = vector.broadcast %286 : vector<1x128xf32> to vector<32x128xf32>
      %288 = arith.addf %285, %287 : vector<32x128xf32>
      %c0_87 = arith.constant 0 : index
      %c0_88 = arith.constant 0 : index
      %289 = vector.load %arg11[%c0_87, %c0_88] : memref<32x128xf32, #tpu.memory_space<vmem>>, vector<32x128xf32>
      tpu.vector_store %arg11[%c0_87, %c0_88], %288 {strides = array<i32>} : memref<32x128xf32, #tpu.memory_space<vmem>>, vector<32x128xf32>,
    } else {
    }
    %c0 = arith.constant 0 : index
    %c0_1 = arith.constant 0 : index
    %3 = vector.load %arg11[%c0, %c0_1] : memref<32x128xf32, #tpu.memory_space<vmem>>, vector<32x128xf32>
    %c0_2 = arith.constant 0 : index
    %c0_3 = arith.constant 0 : index
    %c0_4 = arith.constant 0 : index
    %4 = vector.load %arg4[%c0_2, %c0_3, %c0_4] : memref<1x16x128xf32, #tpu.memory_space<vmem>>, vector<1x16x128xf32>
    %5 = vector.shape_cast %4 : vector<1x16x128xf32> to vector<16x128xf32>
    %6 = tpu.iota {dimensions = array<i32: 0>} : vector<32x1xi32>
    %c16_i32 = arith.constant 16 : i32
    %c0_i32_5 = arith.constant 0 : i32
    %7 = arith.cmpi eq, %c16_i32, %c0_i32_5 : i32
    %c1_i32 = arith.constant 1 : i32
    %8 = arith.select %7, %c1_i32, %c16_i32 : i32
    %9 = vector.broadcast %8 : i32 to vector<32x1xi32>
    %10 = arith.remsi %6, %9 : vector<32x1xi32>
    %c0_i32_6 = arith.constant 0 : i32
    %11 = vector.broadcast %c0_i32_6 : i32 to vector<32x1xi32>
    %12 = arith.cmpi ne, %10, %11 : vector<32x1xi32>
    %c0_i32_7 = arith.constant 0 : i32
    %13 = vector.broadcast %c0_i32_7 : i32 to vector<32x1xi32>
    %14 = arith.cmpi slt, %10, %13 : vector<32x1xi32>
    %c0_i32_8 = arith.constant 0 : i32
    %15 = arith.cmpi slt, %8, %c0_i32_8 : i32
    %16 = vector.broadcast %15 : i1 to vector<32x1xi1>
    %17 = vector.broadcast %16 : vector<32x1xi1> to vector<32x1xi1>
    %18 = arith.xori %14, %17 : vector<32x1xi1>
    %19 = arith.andi %18, %12 : vector<32x1xi1>
    %20 = vector.broadcast %8 : i32 to vector<32x1xi32>
    %21 = arith.addi %10, %20 : vector<32x1xi32>
    %22 = arith.select %19, %21, %10 : vector<32x1xi1>, vector<32x1xi32>
    %23 = vector.extract_strided_slice %5 {offsets = [0, 0], sizes = [1, 128], strides = [1, 1]} : vector<16x128xf32> to vector<1x128xf32>
    %24 = vector.broadcast %23 : vector<1x128xf32> to vector<32x128xf32>
    %25 = arith.mulf %3, %24 : vector<32x128xf32>
    %c1_i32_9 = arith.constant 1 : i32
    %26 = tpu.dynamic_rotate %3 by %c1_i32_9 dim 0 : vector<32x128xf32>, i32 -> vector<32x128xf32>
    %c1_i32_10 = arith.constant 1 : i32
    %27 = vector.broadcast %c1_i32_10 : i32 to vector<32x1xi32>
    %28 = arith.cmpi sge, %22, %27 : vector<32x1xi32>
    %cst = arith.constant 0.000000e+00 : f32
    %29 = vector.shape_cast %28 : vector<32x1xi1> to vector<32x1xi1>
    %30 = vector.broadcast %29 : vector<32x1xi1> to vector<32x128xi1>
    %31 = vector.broadcast %cst : f32 to vector<32x128xf32>
    %32 = arith.select %30, %26, %31 : vector<32x128xi1>, vector<32x128xf32>
    %33 = vector.extract_strided_slice %5 {offsets = [1, 0], sizes = [1, 128], strides = [1, 1]} : vector<16x128xf32> to vector<1x128xf32>
    %34 = vector.broadcast %33 : vector<1x128xf32> to vector<32x128xf32>
    %35 = arith.mulf %32, %34 : vector<32x128xf32>
    %36 = arith.addf %25, %35 : vector<32x128xf32>
    %c2_i32 = arith.constant 2 : i32
    %37 = tpu.dynamic_rotate %3 by %c2_i32 dim 0 : vector<32x128xf32>, i32 -> vector<32x128xf32>
    %c2_i32_11 = arith.constant 2 : i32
    %38 = vector.broadcast %c2_i32_11 : i32 to vector<32x1xi32>
    %39 = arith.cmpi sge, %22, %38 : vector<32x1xi32>
    %cst_12 = arith.constant 0.000000e+00 : f32
    %40 = vector.shape_cast %39 : vector<32x1xi1> to vector<32x1xi1>
    %41 = vector.broadcast %40 : vector<32x1xi1> to vector<32x128xi1>
    %42 = vector.broadcast %cst_12 : f32 to vector<32x128xf32>
    %43 = arith.select %41, %37, %42 : vector<32x128xi1>, vector<32x128xf32>
    %44 = vector.extract_strided_slice %5 {offsets = [2, 0], sizes = [1, 128], strides = [1, 1]} : vector<16x128xf32> to vector<1x128xf32>
    %45 = vector.broadcast %44 : vector<1x128xf32> to vector<32x128xf32>
    %46 = arith.mulf %43, %45 : vector<32x128xf32>
    %47 = arith.addf %36, %46 : vector<32x128xf32>
    %c3_i32 = arith.constant 3 : i32
    %48 = tpu.dynamic_rotate %3 by %c3_i32 dim 0 : vector<32x128xf32>, i32 -> vector<32x128xf32>
    %c3_i32_13 = arith.constant 3 : i32
    %49 = vector.broadcast %c3_i32_13 : i32 to vector<32x1xi32>
    %50 = arith.cmpi sge, %22, %49 : vector<32x1xi32>
    %cst_14 = arith.constant 0.000000e+00 : f32
    %51 = vector.shape_cast %50 : vector<32x1xi1> to vector<32x1xi1>
    %52 = vector.broadcast %51 : vector<32x1xi1> to vector<32x128xi1>
    %53 = vector.broadcast %cst_14 : f32 to vector<32x128xf32>
    %54 = arith.select %52, %48, %53 : vector<32x128xi1>, vector<32x128xf32>
    %55 = vector.extract_strided_slice %5 {offsets = [3, 0], sizes = [1, 128], strides = [1, 1]} : vector<16x128xf32> to vector<1x128xf32>
    %56 = vector.broadcast %55 : vector<1x128xf32> to vector<32x128xf32>
    %57 = arith.mulf %54, %56 : vector<32x128xf32>
    %58 = arith.addf %47, %57 : vector<32x128xf32>
    %c4_i32 = arith.constant 4 : i32
    %59 = tpu.dynamic_rotate %3 by %c4_i32 dim 0 : vector<32x128xf32>, i32 -> vector<32x128xf32>
    %c4_i32_15 = arith.constant 4 : i32
    %60 = vector.broadcast %c4_i32_15 : i32 to vector<32x1xi32>
    %61 = arith.cmpi sge, %22, %60 : vector<32x1xi32>
    %cst_16 = arith.constant 0.000000e+00 : f32
    %62 = vector.shape_cast %61 : vector<32x1xi1> to vector<32x1xi1>
    %63 = vector.broadcast %62 : vector<32x1xi1> to vector<32x128xi1>
    %64 = vector.broadcast %cst_16 : f32 to vector<32x128xf32>
    %65 = arith.select %63, %59, %64 : vector<32x128xi1>, vector<32x128xf32>
    %66 = vector.extract_strided_slice %5 {offsets = [4, 0], sizes = [1, 128], strides = [1, 1]} : vector<16x128xf32> to vector<1x128xf32>
    %67 = vector.broadcast %66 : vector<1x128xf32> to vector<32x128xf32>
    %68 = arith.mulf %65, %67 : vector<32x128xf32>
    %69 = arith.addf %58, %68 : vector<32x128xf32>
    %c5_i32 = arith.constant 5 : i32
    %70 = tpu.dynamic_rotate %3 by %c5_i32 dim 0 : vector<32x128xf32>, i32 -> vector<32x128xf32>
    %c5_i32_17 = arith.constant 5 : i32
    %71 = vector.broadcast %c5_i32_17 : i32 to vector<32x1xi32>
    %72 = arith.cmpi sge, %22, %71 : vector<32x1xi32>
    %cst_18 = arith.constant 0.000000e+00 : f32
    %73 = vector.shape_cast %72 : vector<32x1xi1> to vector<32x1xi1>
    %74 = vector.broadcast %73 : vector<32x1xi1> to vector<32x128xi1>
    %75 = vector.broadcast %cst_18 : f32 to vector<32x128xf32>
    %76 = arith.select %74, %70, %75 : vector<32x128xi1>, vector<32x128xf32>
    %77 = vector.extract_strided_slice %5 {offsets = [5, 0], sizes = [1, 128], strides = [1, 1]} : vector<16x128xf32> to vector<1x128xf32>
    %78 = vector.broadcast %77 : vector<1x128xf32> to vector<32x128xf32>
    %79 = arith.mulf %76, %78 : vector<32x128xf32>
    %80 = arith.addf %69, %79 : vector<32x128xf32>
    %c6_i32 = arith.constant 6 : i32
    %81 = tpu.dynamic_rotate %3 by %c6_i32 dim 0 : vector<32x128xf32>, i32 -> vector<32x128xf32>
    %c6_i32_19 = arith.constant 6 : i32
    %82 = vector.broadcast %c6_i32_19 : i32 to vector<32x1xi32>
    %83 = arith.cmpi sge, %22, %82 : vector<32x1xi32>
    %cst_20 = arith.constant 0.000000e+00 : f32
    %84 = vector.shape_cast %83 : vector<32x1xi1> to vector<32x1xi1>
    %85 = vector.broadcast %84 : vector<32x1xi1> to vector<32x128xi1>
    %86 = vector.broadcast %cst_20 : f32 to vector<32x128xf32>
    %87 = arith.select %85, %81, %86 : vector<32x128xi1>, vector<32x128xf32>
    %88 = vector.extract_strided_slice %5 {offsets = [6, 0], sizes = [1, 128], strides = [1, 1]} : vector<16x128xf32> to vector<1x128xf32>
    %89 = vector.broadcast %88 : vector<1x128xf32> to vector<32x128xf32>
    %90 = arith.mulf %87, %89 : vector<32x128xf32>
    %91 = arith.addf %80, %90 : vector<32x128xf32>
    %c7_i32 = arith.constant 7 : i32
    %92 = tpu.dynamic_rotate %3 by %c7_i32 dim 0 : vector<32x128xf32>, i32 -> vector<32x128xf32>
    %c7_i32_21 = arith.constant 7 : i32
    %93 = vector.broadcast %c7_i32_21 : i32 to vector<32x1xi32>
    %94 = arith.cmpi sge, %22, %93 : vector<32x1xi32>
    %cst_22 = arith.constant 0.000000e+00 : f32
    %95 = vector.shape_cast %94 : vector<32x1xi1> to vector<32x1xi1>
    %96 = vector.broadcast %95 : vector<32x1xi1> to vector<32x128xi1>
    %97 = vector.broadcast %cst_22 : f32 to vector<32x128xf32>
    %98 = arith.select %96, %92, %97 : vector<32x128xi1>, vector<32x128xf32>
    %99 = vector.extract_strided_slice %5 {offsets = [7, 0], sizes = [1, 128], strides = [1, 1]} : vector<16x128xf32> to vector<1x128xf32>
    %100 = vector.broadcast %99 : vector<1x128xf32> to vector<32x128xf32>
    %101 = arith.mulf %98, %100 : vector<32x128xf32>
    %102 = arith.addf %91, %101 : vector<32x128xf32>
    %c8_i32 = arith.constant 8 : i32
    %103 = tpu.dynamic_rotate %3 by %c8_i32 dim 0 : vector<32x128xf32>, i32 -> vector<32x128xf32>
    %c8_i32_23 = arith.constant 8 : i32
    %104 = vector.broadcast %c8_i32_23 : i32 to vector<32x1xi32>
    %105 = arith.cmpi sge, %22, %104 : vector<32x1xi32>
    %cst_24 = arith.constant 0.000000e+00 : f32
    %106 = vector.shape_cast %105 : vector<32x1xi1> to vector<32x1xi1>
    %107 = vector.broadcast %106 : vector<32x1xi1> to vector<32x128xi1>
    %108 = vector.broadcast %cst_24 : f32 to vector<32x128xf32>
    %109 = arith.select %107, %103, %108 : vector<32x128xi1>, vector<32x128xf32>
    %110 = vector.extract_strided_slice %5 {offsets = [8, 0], sizes = [1, 128], strides = [1, 1]} : vector<16x128xf32> to vector<1x128xf32>
    %111 = vector.broadcast %110 : vector<1x128xf32> to vector<32x128xf32>
    %112 = arith.mulf %109, %111 : vector<32x128xf32>
    %113 = arith.addf %102, %112 : vector<32x128xf32>
    %c9_i32 = arith.constant 9 : i32
    %114 = tpu.dynamic_rotate %3 by %c9_i32 dim 0 : vector<32x128xf32>, i32 -> vector<32x128xf32>
    %c9_i32_25 = arith.constant 9 : i32
    %115 = vector.broadcast %c9_i32_25 : i32 to vector<32x1xi32>
    %116 = arith.cmpi sge, %22, %115 : vector<32x1xi32>
    %cst_26 = arith.constant 0.000000e+00 : f32
    %117 = vector.shape_cast %116 : vector<32x1xi1> to vector<32x1xi1>
    %118 = vector.broadcast %117 : vector<32x1xi1> to vector<32x128xi1>
    %119 = vector.broadcast %cst_26 : f32 to vector<32x128xf32>
    %120 = arith.select %118, %114, %119 : vector<32x128xi1>, vector<32x128xf32>
    %121 = vector.extract_strided_slice %5 {offsets = [9, 0], sizes = [1, 128], strides = [1, 1]} : vector<16x128xf32> to vector<1x128xf32>
    %122 = vector.broadcast %121 : vector<1x128xf32> to vector<32x128xf32>
    %123 = arith.mulf %120, %122 : vector<32x128xf32>
    %124 = arith.addf %113, %123 : vector<32x128xf32>
    %c10_i32 = arith.constant 10 : i32
    %125 = tpu.dynamic_rotate %3 by %c10_i32 dim 0 : vector<32x128xf32>, i32 -> vector<32x128xf32>
    %c10_i32_27 = arith.constant 10 : i32
    %126 = vector.broadcast %c10_i32_27 : i32 to vector<32x1xi32>
    %127 = arith.cmpi sge, %22, %126 : vector<32x1xi32>
    %cst_28 = arith.constant 0.000000e+00 : f32
    %128 = vector.shape_cast %127 : vector<32x1xi1> to vector<32x1xi1>
    %129 = vector.broadcast %128 : vector<32x1xi1> to vector<32x128xi1>
    %130 = vector.broadcast %cst_28 : f32 to vector<32x128xf32>
    %131 = arith.select %129, %125, %130 : vector<32x128xi1>, vector<32x128xf32>
    %132 = vector.extract_strided_slice %5 {offsets = [10, 0], sizes = [1, 128], strides = [1, 1]} : vector<16x128xf32> to vector<1x128xf32>
    %133 = vector.broadcast %132 : vector<1x128xf32> to vector<32x128xf32>
    %134 = arith.mulf %131, %133 : vector<32x128xf32>
    %135 = arith.addf %124, %134 : vector<32x128xf32>
    %c11_i32 = arith.constant 11 : i32
    %136 = tpu.dynamic_rotate %3 by %c11_i32 dim 0 : vector<32x128xf32>, i32 -> vector<32x128xf32>
    %c11_i32_29 = arith.constant 11 : i32
    %137 = vector.broadcast %c11_i32_29 : i32 to vector<32x1xi32>
    %138 = arith.cmpi sge, %22, %137 : vector<32x1xi32>
    %cst_30 = arith.constant 0.000000e+00 : f32
    %139 = vector.shape_cast %138 : vector<32x1xi1> to vector<32x1xi1>
    %140 = vector.broadcast %139 : vector<32x1xi1> to vector<32x128xi1>
    %141 = vector.broadcast %cst_30 : f32 to vector<32x128xf32>
    %142 = arith.select %140, %136, %141 : vector<32x128xi1>, vector<32x128xf32>
    %143 = vector.extract_strided_slice %5 {offsets = [11, 0], sizes = [1, 128], strides = [1, 1]} : vector<16x128xf32> to vector<1x128xf32>
    %144 = vector.broadcast %143 : vector<1x128xf32> to vector<32x128xf32>
    %145 = arith.mulf %142, %144 : vector<32x128xf32>
    %146 = arith.addf %135, %145 : vector<32x128xf32>
    %c12_i32 = arith.constant 12 : i32
    %147 = tpu.dynamic_rotate %3 by %c12_i32 dim 0 : vector<32x128xf32>, i32 -> vector<32x128xf32>
    %c12_i32_31 = arith.constant 12 : i32
    %148 = vector.broadcast %c12_i32_31 : i32 to vector<32x1xi32>
    %149 = arith.cmpi sge, %22, %148 : vector<32x1xi32>
    %cst_32 = arith.constant 0.000000e+00 : f32
    %150 = vector.shape_cast %149 : vector<32x1xi1> to vector<32x1xi1>
    %151 = vector.broadcast %150 : vector<32x1xi1> to vector<32x128xi1>
    %152 = vector.broadcast %cst_32 : f32 to vector<32x128xf32>
    %153 = arith.select %151, %147, %152 : vector<32x128xi1>, vector<32x128xf32>
    %154 = vector.extract_strided_slice %5 {offsets = [12, 0], sizes = [1, 128], strides = [1, 1]} : vector<16x128xf32> to vector<1x128xf32>
    %155 = vector.broadcast %154 : vector<1x128xf32> to vector<32x128xf32>
    %156 = arith.mulf %153, %155 : vector<32x128xf32>
    %157 = arith.addf %146, %156 : vector<32x128xf32>
    %c13_i32 = arith.constant 13 : i32
    %158 = tpu.dynamic_rotate %3 by %c13_i32 dim 0 : vector<32x128xf32>, i32 -> vector<32x128xf32>
    %c13_i32_33 = arith.constant 13 : i32
    %159 = vector.broadcast %c13_i32_33 : i32 to vector<32x1xi32>
    %160 = arith.cmpi sge, %22, %159 : vector<32x1xi32>
    %cst_34 = arith.constant 0.000000e+00 : f32
    %161 = vector.shape_cast %160 : vector<32x1xi1> to vector<32x1xi1>
    %162 = vector.broadcast %161 : vector<32x1xi1> to vector<32x128xi1>
    %163 = vector.broadcast %cst_34 : f32 to vector<32x128xf32>
    %164 = arith.select %162, %158, %163 : vector<32x128xi1>, vector<32x128xf32>
    %165 = vector.extract_strided_slice %5 {offsets = [13, 0], sizes = [1, 128], strides = [1, 1]} : vector<16x128xf32> to vector<1x128xf32>
    %166 = vector.broadcast %165 : vector<1x128xf32> to vector<32x128xf32>
    %167 = arith.mulf %164, %166 : vector<32x128xf32>
    %168 = arith.addf %157, %167 : vector<32x128xf32>
    %c14_i32 = arith.constant 14 : i32
    %169 = tpu.dynamic_rotate %3 by %c14_i32 dim 0 : vector<32x128xf32>, i32 -> vector<32x128xf32>
    %c14_i32_35 = arith.constant 14 : i32
    %170 = vector.broadcast %c14_i32_35 : i32 to vector<32x1xi32>
    %171 = arith.cmpi sge, %22, %170 : vector<32x1xi32>
    %cst_36 = arith.constant 0.000000e+00 : f32
    %172 = vector.shape_cast %171 : vector<32x1xi1> to vector<32x1xi1>
    %173 = vector.broadcast %172 : vector<32x1xi1> to vector<32x128xi1>
    %174 = vector.broadcast %cst_36 : f32 to vector<32x128xf32>
    %175 = arith.select %173, %169, %174 : vector<32x128xi1>, vector<32x128xf32>
    %176 = vector.extract_strided_slice %5 {offsets = [14, 0], sizes = [1, 128], strides = [1, 1]} : vector<16x128xf32> to vector<1x128xf32>
    %177 = vector.broadcast %176 : vector<1x128xf32> to vector<32x128xf32>
    %178 = arith.mulf %175, %177 : vector<32x128xf32>
    %179 = arith.addf %168, %178 : vector<32x128xf32>
    %c15_i32 = arith.constant 15 : i32
    %180 = tpu.dynamic_rotate %3 by %c15_i32 dim 0 : vector<32x128xf32>, i32 -> vector<32x128xf32>
    %c15_i32_37 = arith.constant 15 : i32
    %181 = vector.broadcast %c15_i32_37 : i32 to vector<32x1xi32>
    %182 = arith.cmpi sge, %22, %181 : vector<32x1xi32>
    %cst_38 = arith.constant 0.000000e+00 : f32
    %183 = vector.shape_cast %182 : vector<32x1xi1> to vector<32x1xi1>
    %184 = vector.broadcast %183 : vector<32x1xi1> to vector<32x128xi1>
    %185 = vector.broadcast %cst_38 : f32 to vector<32x128xf32>
    %186 = arith.select %184, %180, %185 : vector<32x128xi1>, vector<32x128xf32>
    %187 = vector.extract_strided_slice %5 {offsets = [15, 0], sizes = [1, 128], strides = [1, 1]} : vector<16x128xf32> to vector<1x128xf32>
    %188 = vector.broadcast %187 : vector<1x128xf32> to vector<32x128xf32>
    %189 = arith.mulf %186, %188 : vector<32x128xf32>
    %190 = arith.addf %179, %189 : vector<32x128xf32>
    %c0_39 = arith.constant 0 : index
    %c0_40 = arith.constant 0 : index
    %c0_41 = arith.constant 0 : index
    %191 = vector.load %arg5[%c0_39, %c0_40, %c0_41] : memref<1x1x128xf32, #tpu.memory_space<vmem>>, vector<1x1x128xf32>
    %192 = vector.shape_cast %191 : vector<1x1x128xf32> to vector<1x128xf32>
    %193 = vector.broadcast %192 : vector<1x128xf32> to vector<32x128xf32>
    %194 = arith.mulf %3, %193 : vector<32x128xf32>
    %195 = arith.addf %190, %194 : vector<32x128xf32>
    %cst_42 = arith.constant 5.000000e-01 : f32
    %196 = vector.broadcast %cst_42 : f32 to vector<32x128xf32>
    %197 = arith.mulf %196, %195 : vector<32x128xf32>
    %cst_43 = arith.constant 0.707106769 : f32
    %198 = vector.broadcast %cst_43 : f32 to vector<32x128xf32>
    %199 = arith.mulf %195, %198 : vector<32x128xf32>
    %cst_44 = arith.constant 0.000000e+00 : f32
    %200 = vector.broadcast %cst_44 : f32 to vector<32x128xf32>
    %201 = arith.cmpf oge, %199, %200 : vector<32x128xf32>
    %cst_45 = arith.constant 1.000000e+00 : f32
    %cst_46 = arith.constant -1.000000e+00 : f32
    %202 = vector.broadcast %cst_45 : f32 to vector<32x128xf32>
    %203 = vector.broadcast %cst_46 : f32 to vector<32x128xf32>
    %204 = arith.select %201, %202, %203 : vector<32x128xi1>, vector<32x128xf32>
    %205 = math.absf %199 : vector<32x128xf32>
    %cst_47 = arith.constant 0.327591091 : f32
    %206 = vector.broadcast %cst_47 : f32 to vector<32x128xf32>
    %207 = arith.mulf %206, %205 : vector<32x128xf32>
    %cst_48 = arith.constant 1.000000e+00 : f32
    %208 = vector.broadcast %cst_48 : f32 to vector<32x128xf32>
    %209 = arith.addf %208, %207 : vector<32x128xf32>
    %210 = tpu.reciprocal %209 {approx = true} : vector<32x128xf32> -> vector<32x128xf32>
    %cst_49 = arith.constant 1.06140542 : f32
    %211 = vector.broadcast %cst_49 : f32 to vector<32x128xf32>
    %212 = arith.mulf %211, %210 : vector<32x128xf32>
    %cst_50 = arith.constant -1.45315206 : f32
    %213 = vector.broadcast %cst_50 : f32 to vector<32x128xf32>
    %214 = arith.addf %212, %213 : vector<32x128xf32>
    %215 = arith.mulf %214, %210 : vector<32x128xf32>
    %cst_51 = arith.constant 1.42141378 : f32
    %216 = vector.broadcast %cst_51 : f32 to vector<32x128xf32>
    %217 = arith.addf %215, %216 : vector<32x128xf32>
    %218 = arith.mulf %217, %210 : vector<32x128xf32>
    %cst_52 = arith.constant -0.284496725 : f32
    %219 = vector.broadcast %cst_52 : f32 to vector<32x128xf32>
    %220 = arith.addf %218, %219 : vector<32x128xf32>
    %221 = arith.mulf %220, %210 : vector<32x128xf32>
    %cst_53 = arith.constant 0.254829586 : f32
    %222 = vector.broadcast %cst_53 : f32 to vector<32x128xf32>
    %223 = arith.addf %221, %222 : vector<32x128xf32>
    %224 = arith.mulf %223, %210 : vector<32x128xf32>
    %cst_54 = arith.constant 0.000000e+00 : f32
    %225 = vector.broadcast %cst_54 : f32 to vector<32x128xf32>
    %226 = arith.subf %225, %205 : vector<32x128xf32>
    %227 = arith.mulf %226, %205 : vector<32x128xf32>
    %228 = math.exp %227 : vector<32x128xf32>
    %229 = arith.mulf %224, %228 : vector<32x128xf32>
    %cst_55 = arith.constant 1.000000e+00 : f32
    %230 = vector.broadcast %cst_55 : f32 to vector<32x128xf32>
    %231 = arith.subf %230, %229 : vector<32x128xf32>
    %232 = arith.mulf %204, %231 : vector<32x128xf32>
    %cst_56 = arith.constant 1.000000e+00 : f32
    %233 = vector.broadcast %cst_56 : f32 to vector<32x128xf32>
    %234 = arith.addf %233, %232 : vector<32x128xf32>
    %235 = arith.mulf %197, %234 : vector<32x128xf32>
    %236 = arith.truncf %235 : vector<32x128xf32> to vector<32x128xbf16>
    %c0_57 = arith.constant 0 : index
    %c0_58 = arith.constant 0 : index
    %c0_59 = arith.constant 0 : index
    %237 = vector.load %arg6[%c0_57, %c0_58, %c0_59] : memref<1x128x256xbf16, #tpu.memory_space<vmem>>, vector<1x128x256xbf16>
    %238 = vector.shape_cast %237 : vector<1x128x256xbf16> to vector<128x256xbf16>
    %cst_60 = arith.constant dense<0.000000e+00> : vector<32x256xf32>
    %239 = tpu.matmul %236, %238, %cst_60 {dimension_numbers = #tpu.dot_dimension_numbers<[1], [0], [0], [1], [0, 0, 1, 1], [], []>} : vector<32x128xbf16>, vector<128x256xbf16>, vector<32x256xf32> -> vector<32x256xf32>
    %c0_61 = arith.constant 0 : index
    %c0_62 = arith.constant 0 : index
    %c0_63 = arith.constant 0 : index
    %240 = vector.load %arg7[%c0_61, %c0_62, %c0_63] : memref<1x1x256xf32, #tpu.memory_space<vmem>>, vector<1x1x256xf32>
    %241 = vector.shape_cast %240 : vector<1x1x256xf32> to vector<1x256xf32>
    %242 = vector.broadcast %241 : vector<1x256xf32> to vector<32x256xf32>
    %243 = arith.addf %239, %242 : vector<32x256xf32>
    %244 = vector.extract_strided_slice %243 {offsets = [0, 0], sizes = [32, 128], strides = [1, 1]} : vector<32x256xf32> to vector<32x128xf32>
    %245 = vector.extract_strided_slice %243 {offsets = [0, 128], sizes = [32, 128], strides = [1, 1]} : vector<32x256xf32> to vector<32x128xf32>
    %246 = arith.negf %245 : vector<32x128xf32>
    %247 = math.exp %246 : vector<32x128xf32>
    %cst_64 = arith.constant 1.000000e+00 : f32
    %248 = vector.broadcast %cst_64 : f32 to vector<32x128xf32>
    %249 = arith.addf %248, %247 : vector<32x128xf32>
    %250 = arith.divf %248, %249 : vector<32x128xf32>
    %251 = arith.mulf %244, %250 : vector<32x128xf32>
    %252 = arith.addf %251, %3 : vector<32x128xf32>
    %cst_65 = arith.constant dense<0.000000e+00> : vector<32xf32>
    %253 = vector.multi_reduction <add>, %252, %cst_65 [1] : vector<32x128xf32> to vector<32xf32>
    %254 = vector.shape_cast %253 : vector<32xf32> to vector<32x1xf32>
    %cst_66 = arith.constant 1.280000e+02 : f32
    %255 = vector.broadcast %cst_66 : f32 to vector<32x1xf32>
    %256 = arith.divf %254, %255 : vector<32x1xf32>
    %257 = vector.broadcast %256 : vector<32x1xf32> to vector<32x128xf32>
    %258 = arith.subf %252, %257 : vector<32x128xf32>
    %259 = arith.mulf %258, %258 : vector<32x128xf32>
    %cst_67 = arith.constant dense<0.000000e+00> : vector<32xf32>
    %260 = vector.multi_reduction <add>, %259, %cst_67 [1] : vector<32x128xf32> to vector<32xf32>
    %261 = vector.shape_cast %260 : vector<32xf32> to vector<32x1xf32>
    %cst_68 = arith.constant 1.280000e+02 : f32
    %262 = vector.broadcast %cst_68 : f32 to vector<32x1xf32>
    %263 = arith.divf %261, %262 : vector<32x1xf32>
    %264 = vector.broadcast %256 : vector<32x1xf32> to vector<32x128xf32>
    %265 = arith.subf %252, %264 : vector<32x128xf32>
    %cst_69 = arith.constant 9.99999974E-6 : f32
    %266 = vector.broadcast %cst_69 : f32 to vector<32x1xf32>
    %267 = arith.addf %263, %266 : vector<32x1xf32>
    %268 = math.rsqrt %267 : vector<32x1xf32>
    %269 = vector.broadcast %268 : vector<32x1xf32> to vector<32x128xf32>
    %270 = arith.mulf %265, %269 : vector<32x128xf32>
    %c0_70 = arith.constant 0 : index
    %c0_71 = arith.constant 0 : index
    %c0_72 = arith.constant 0 : index
    %271 = vector.load %arg8[%c0_70, %c0_71, %c0_72] : memref<1x1x128xf32, #tpu.memory_space<vmem>>, vector<1x1x128xf32>
    %272 = vector.shape_cast %271 : vector<1x1x128xf32> to vector<1x128xf32>
    %273 = vector.broadcast %272 : vector<1x128xf32> to vector<32x128xf32>
    %274 = arith.mulf %270, %273 : vector<32x128xf32>
    %c0_73 = arith.constant 0 : index
    %c0_74 = arith.constant 0 : index
    %c0_75 = arith.constant 0 : index
    %275 = vector.load %arg9[%c0_73, %c0_74, %c0_75] : memref<1x1x128xf32, #tpu.memory_space<vmem>>, vector<1x1x128xf32>
    %276 = vector.shape_cast %275 : vector<1x1x128xf32> to vector<1x128xf32>
    %277 = vector.broadcast %276 : vector<1x128xf32> to vector<32x128xf32>
    %278 = arith.addf %274, %277 : vector<32x128xf32>
    %c0_76 = arith.constant 0 : index
    %c0_77 = arith.constant 0 : index
    %279 = vector.load %arg11[%c0_76, %c0_77] : memref<32x128xf32, #tpu.memory_space<vmem>>, vector<32x128xf32>
    tpu.vector_store %arg11[%c0_76, %c0_77], %278 {strides = array<i32>} : memref<32x128xf32, #tpu.memory_space<vmem>>, vector<32x128xf32>,
    %c1_i32_78 = arith.constant 1 : i32
    %280 = arith.cmpi eq, %arg0, %c1_i32_78 : i32
    %281 = arith.extui %280 : i1 to i32
    %c0_i32_79 = arith.constant 0 : i32
    %282 = arith.cmpi ne, %281, %c0_i32_79 : i32
    scf.if %282 {
      %283 = vector.shape_cast %278 : vector<32x128xf32> to vector<2x16x128xf32>
      %cst_80 = arith.constant dense<0.000000e+00> : vector<2x128xf32>
      %284 = vector.multi_reduction <add>, %283, %cst_80 [1] : vector<2x16x128xf32> to vector<2x128xf32>
      %cst_81 = arith.constant 1.600000e+01 : f32
      %285 = vector.broadcast %cst_81 : f32 to vector<2x128xf32>
      %286 = arith.divf %284, %285 : vector<2x128xf32>
      %c0_82 = arith.constant 0 : index
      %c0_83 = arith.constant 0 : index
      %287 = vector.load %arg10[%c0_82, %c0_83] : memref<2x128xf32, #tpu.memory_space<vmem>>, vector<2x128xf32>
      tpu.vector_store %arg10[%c0_82, %c0_83], %286 {strides = array<i32>} : memref<2x128xf32, #tpu.memory_space<vmem>>, vector<2x128xf32>,
    } else {
    }
    return
  }
  func.func @transform_0(%arg0: i32) -> (i32, i32) {
    %c0_i32 = arith.constant 0 : i32
    %c0_i32_0 = arith.constant 0 : i32
    %c0_i32_1 = arith.constant 0 : i32
    return %c0_i32, %c0_i32_0 : i32, i32
  }
  func.func @transform_1(%arg0: i32) -> (i32, i32) {
    %c0_i32 = arith.constant 0 : i32
    %c0_i32_0 = arith.constant 0 : i32
    %c0_i32_1 = arith.constant 0 : i32
    return %c0_i32, %c0_i32_0 : i32, i32
  }
  func.func @transform_2(%arg0: i32) -> (i32, i32) {
    %c0_i32 = arith.constant 0 : i32
    %c0_i32_0 = arith.constant 0 : i32
    %c0_i32_1 = arith.constant 0 : i32
    return %c0_i32, %c0_i32_0 : i32, i32
  }
  func.func @transform_3(%arg0: i32) -> (i32, i32, i32) {
    %c0_i32 = arith.constant 0 : i32
    %c0_i32_0 = arith.constant 0 : i32
    %c0_i32_1 = arith.constant 0 : i32
    return %arg0, %c0_i32, %c0_i32_0 : i32, i32, i32
  }
  func.func @transform_4(%arg0: i32) -> (i32, i32, i32) {
    %c0_i32 = arith.constant 0 : i32
    %c0_i32_0 = arith.constant 0 : i32
    %c0_i32_1 = arith.constant 0 : i32
    return %arg0, %c0_i32, %c0_i32_0 : i32, i32, i32
  }
  func.func @transform_5(%arg0: i32) -> (i32, i32, i32) {
    %c0_i32 = arith.constant 0 : i32
    %c0_i32_0 = arith.constant 0 : i32
    %c0_i32_1 = arith.constant 0 : i32
    return %arg0, %c0_i32, %c0_i32_0 : i32, i32, i32
  }
  func.func @transform_6(%arg0: i32) -> (i32, i32, i32) {
    %c0_i32 = arith.constant 0 : i32
    %c0_i32_0 = arith.constant 0 : i32
    %c0_i32_1 = arith.constant 0 : i32
    return %arg0, %c0_i32, %c0_i32_0 : i32, i32, i32
  }
  func.func @transform_7(%arg0: i32) -> (i32, i32, i32) {
    %c0_i32 = arith.constant 0 : i32
    %c0_i32_0 = arith.constant 0 : i32
    %c0_i32_1 = arith.constant 0 : i32
    return %arg0, %c0_i32, %c0_i32_0 : i32, i32, i32
  }
  func.func @transform_8(%arg0: i32) -> (i32, i32, i32) {
    %c0_i32 = arith.constant 0 : i32
    %c0_i32_0 = arith.constant 0 : i32
    %c0_i32_1 = arith.constant 0 : i32
    return %arg0, %c0_i32, %c0_i32_0 : i32, i32, i32
  }
  func.func @transform_9(%arg0: i32) -> (i32, i32) {
    %c0_i32 = arith.constant 0 : i32
    %c0_i32_0 = arith.constant 0 : i32
    %c0_i32_1 = arith.constant 0 : i32
    return %c0_i32, %c0_i32_0 : i32, i32
  }
}

</mosaic_0001>

<llo_original>
// kernel: custom-call
$region0: #{custom-call}
  %s0 = inlined_call_operand.vmem [shape: f32[2,6], index: 0, kind: output, shape index: {}]

// kernel: s4_model_forward.1
$region0: #{s4_model_forward.1}
  #allocation0 [shape = 'u32[]', space=smem, size = 0x4, offset = 0x4, fixed_abs, tag = 'smem constant byte address 0x4 - core index']
  #allocation1 [shape = 'u32[144,128]{1,0:T(1,128)}', space=vmem, size = 0x12000, scoped, tag = 'internal scratch']
  #allocation2 [shape = 'f32[32,128]{1,0:T(8,128)}', space=vmem, size = 0x4000, scoped, tag = 'scratch operand']
  %s0 = inlined_call_operand.vmem [shape: f32[32,16], index: 0, kind: input, shape index: {}]
  %s1 = inlined_call_operand.vmem [shape: f32[16,128], index: 1, kind: input, shape index: {}]
  %s2 = inlined_call_operand.hbm [shape: f32[1,128], index: 2, kind: input, shape index: {}]
  %s3 = inlined_call_operand.hbm [shape: f32[2,16,128], index: 3, kind: input, shape index: {}]
  %s4 = inlined_call_operand.hbm [shape: f32[2,1,128], index: 4, kind: input, shape index: {}]
  %s5 = inlined_call_operand.vmem [shape: bf16[2,128,256], index: 5, kind: input, shape index: {}]
  %s6 = inlined_call_operand.vmem [shape: f32[2,1,256], index: 6, kind: input, shape index: {}]
  %s7 = inlined_call_operand.hbm [shape: f32[2,1,128], index: 7, kind: input, shape index: {}]
  %s8 = inlined_call_operand.hbm [shape: f32[2,1,128], index: 8, kind: input, shape index: {}]
  %s9 = inlined_call_operand.vmem [shape: f32[2,128], index: 9, kind: output, shape index: {}]
  %s10 = sld [smem:[#allocation0]]
  $region97: #{s4_model_forward.1} parent=0
    _
  %s12 = ssub.s32 1, %s10
  %s13 = scalar_select 0, %s12, %s10
  $region1: #{s4_model_forward.1} parent=0
    #allocation3 [shape = 'u8[512]{0}', space=vmem, size = 0x400, scoped, tag = 'input window, operand 2, single buffered']
    #allocation4 [shape = 's32[2]{0}', space=sflag, size = 0x8, scoped, tag = 'scoped memory for s4_model_forward.1']
    #allocation5 [shape = 'u8[16384]{0}', space=vmem, size = 0x4000, scoped, tag = 'input window, operand 3']
    #allocation6 [shape = 's32[2]{0}', space=sflag, size = 0x8, scoped, tag = 'scoped memory for s4_model_forward.1']
    #allocation7 [shape = 'u8[1024]{0}', space=vmem, size = 0x400, scoped, tag = 'input window, operand 4']
    #allocation8 [shape = 'u8[1024]{0}', space=vmem, size = 0x400, scoped, tag = 'input window, operand 7']
    #allocation9 [shape = 's32[2]{0}', space=sflag, size = 0x8, scoped, tag = 'scoped memory for s4_model_forward.1']
    #allocation10 [shape = 'u8[1024]{0}', space=vmem, size = 0x400, scoped, tag = 'input window, operand 8']
    %14 = vsyncpa [#allocation4], 0
    %15 = vsyncpa [#allocation6], 0
    %s16 = scalar_lea.sflag [#allocation6], 1
    %17 = vsyncpa %s16, 0
    %18 = vsyncpa [#allocation9], 0
    %s19 = scalar_lea.sflag [#allocation9], 1
    %20 = vsyncpa %s19, 0
    loop: start=0, step=1, limit=4
    $region2: #{s4_model_forward.1} parent=1 // loop_pre_header
      _
    $region3: #{s4_model_forward.1} parent=1 // loop_header
      %s22 = sphi 0, %s26
      %p23 = scmp.ge.s32.totalorder %s22, 4
      %s30 = sphi 0, %s30
      %s32 = sphi 0, %s30
      %s33 = sphi 0, %s32
      %s47 = sphi 0, %s33
      %s51 = sphi 0, %s51
      %s53 = sphi 0, %s51
      %s54 = sphi 0, %s53
      %s68 = sphi 0, %s54
      %s72 = sphi 0, %s72
      %s74 = sphi 0, %s72
      %s75 = sphi 0, %s74
      %s89 = sphi 0, %s75
      %s95 = sphi 0, %s97
      %s98 = sphi 0, %s95
      %s99 = sphi 0, %s98
      %s115 = sphi 0, %s99
      %s121 = sphi 0, %s123
      %s124 = sphi 0, %s121
      %s125 = sphi 0, %s124
      %s141 = sphi 0, %s125
      %s147 = sphi 0, %s149
      %s150 = sphi 0, %s147
      %s151 = sphi 0, %s150
      %s167 = sphi 0, %s151
      %s173 = sphi 0, %s175
      %s176 = sphi 0, %s173
      %s177 = sphi 0, %s176
      %s193 = sphi 0, %s177
      %s199 = sphi 0, %s201
      %s202 = sphi 0, %s199
      %s203 = sphi 0, %s202
      %s219 = sphi 0, %s203
      %s225 = sphi 0, %s227
      %s228 = sphi 0, %s225
      %s229 = sphi 0, %s228
      %s245 = sphi 0, %s229
      %s249 = sphi 0, %s249
      %s251 = sphi 0, %s249
      %s252 = sphi 0, %s251
      %s266 = sphi 0, %s252
    $region4: #{s4_model_forward.1} parent=1 // loop_header_branch
      %25 = sbr.rel (%p23) target = $region8
    $region5: #{s4_model_forward.1} parent=1 // loop_body
      %s27 = ssub.s32 %s22, 1
      %s28 = ssub.s32 %s22, 2
      %s29 = sadd.s32 %s22, 1
      %s31 = sadd.s32 %s30, 1
      %p34 = scmp.eq.s32.totalorder %s22, 1
      %p35 = scmp.ne.s32.totalorder %s30, %s32
      %p36 = scmp.eq.s32.totalorder %s22, 0
      %p37 = por %p35, %p36
      %p38 = scmp.ne.s32.totalorder %s30, %s32
      %p39 = scmp.eq.s32.totalorder %s27, 1
      %p40 = por %p38, %p39
      %p41 = scmp.ne.s32.totalorder %s32, %s33
      %p42 = scmp.eq.s32.totalorder %s27, 0
      %p43 = por %p41, %p42
      %p44 = scmp.ne.s32.totalorder %s32, %s33
      %p45 = scmp.eq.s32.totalorder %s28, 1
      %p46 = por %p44, %p45
      %p48 = scmp.ne.s32.totalorder %s33, %s47
      %p49 = scmp.eq.s32.totalorder %s28, 0
      %p50 = por %p48, %p49
      %s52 = sadd.s32 %s51, 1
      %p55 = scmp.eq.s32.totalorder %s22, 1
      %p56 = scmp.ne.s32.totalorder %s51, %s53
      %p57 = scmp.eq.s32.totalorder %s22, 0
      %p58 = por %p56, %p57
      %p59 = scmp.ne.s32.totalorder %s51, %s53
      %p60 = scmp.eq.s32.totalorder %s27, 1
      %p61 = por %p59, %p60
      %p62 = scmp.ne.s32.totalorder %s53, %s54
      %p63 = scmp.eq.s32.totalorder %s27, 0
      %p64 = por %p62, %p63
      %p65 = scmp.ne.s32.totalorder %s53, %s54
      %p66 = scmp.eq.s32.totalorder %s28, 1
      %p67 = por %p65, %p66
      %p69 = scmp.ne.s32.totalorder %s54, %s68
      %p70 = scmp.eq.s32.totalorder %s28, 0
      %p71 = por %p69, %p70
      %s73 = sadd.s32 %s72, 1
      %p76 = scmp.eq.s32.totalorder %s22, 1
      %p77 = scmp.ne.s32.totalorder %s72, %s74
      %p78 = scmp.eq.s32.totalorder %s22, 0
      %p79 = por %p77, %p78
      %p80 = scmp.ne.s32.totalorder %s72, %s74
      %p81 = scmp.eq.s32.totalorder %s27, 1
      %p82 = por %p80, %p81
      %p83 = scmp.ne.s32.totalorder %s74, %s75
      %p84 = scmp.eq.s32.totalorder %s27, 0
      %p85 = por %p83, %p84
      %p86 = scmp.ne.s32.totalorder %s74, %s75
      %p87 = scmp.eq.s32.totalorder %s28, 1
      %p88 = por %p86, %p87
      %p90 = scmp.ne.s32.totalorder %s75, %s89
      %p91 = scmp.eq.s32.totalorder %s28, 0
      %p92 = por %p90, %p91
      %s93 = ssub.s32 %s22, %s29
      %p94 = scmp.eq.s32.totalorder %s93, 0
      %s96 = sadd.s32 %s95, 1
      %s97 = scalar_select %p94, %s95, %s96
      %p100 = pneg %p94
      %p101 = scmp.eq.s32.totalorder %s22, 1
      %p102 = por %p100, %p101
      %p103 = scmp.ne.s32.totalorder %s95, %s98
      %p104 = scmp.eq.s32.totalorder %s22, 0
      %p105 = por %p103, %p104
      %p106 = scmp.ne.s32.totalorder %s95, %s98
      %p107 = scmp.eq.s32.totalorder %s27, 1
      %p108 = por %p106, %p107
      %p109 = scmp.ne.s32.totalorder %s98, %s99
      %p110 = scmp.eq.s32.totalorder %s27, 0
      %p111 = por %p109, %p110
      %p112 = scmp.ne.s32.totalorder %s98, %s99
      %p113 = scmp.eq.s32.totalorder %s28, 1
      %p114 = por %p112, %p113
      %p116 = scmp.ne.s32.totalorder %s99, %s115
      %p117 = scmp.eq.s32.totalorder %s28, 0
      %p118 = por %p116, %p117
      %s119 = ssub.s32 %s22, %s29
      %p120 = scmp.eq.s32.totalorder %s119, 0
      %s122 = sadd.s32 %s121, 1
      %s123 = scalar_select %p120, %s121, %s122
      %p126 = pneg %p120
      %p127 = scmp.eq.s32.totalorder %s22, 1
      %p128 = por %p126, %p127
      %p129 = scmp.ne.s32.totalorder %s121, %s124
      %p130 = scmp.eq.s32.totalorder %s22, 0
      %p131 = por %p129, %p130
      %p132 = scmp.ne.s32.totalorder %s121, %s124
      %p133 = scmp.eq.s32.totalorder %s27, 1
      %p134 = por %p132, %p133
      %p135 = scmp.ne.s32.totalorder %s124, %s125
      %p136 = scmp.eq.s32.totalorder %s27, 0
      %p137 = por %p135, %p136
      %p138 = scmp.ne.s32.totalorder %s124, %s125
      %p139 = scmp.eq.s32.totalorder %s28, 1
      %p140 = por %p138, %p139
      %p142 = scmp.ne.s32.totalorder %s125, %s141
      %p143 = scmp.eq.s32.totalorder %s28, 0
      %p144 = por %p142, %p143
      %s145 = ssub.s32 %s22, %s29
      %p146 = scmp.eq.s32.totalorder %s145, 0
      %s148 = sadd.s32 %s147, 1
      %s149 = scalar_select %p146, %s147, %s148
      %p152 = pneg %p146
      %p153 = scmp.eq.s32.totalorder %s22, 1
      %p154 = por %p152, %p153
      %p155 = scmp.ne.s32.totalorder %s147, %s150
      %p156 = scmp.eq.s32.totalorder %s22, 0
      %p157 = por %p155, %p156
      %p158 = scmp.ne.s32.totalorder %s147, %s150
      %p159 = scmp.eq.s32.totalorder %s27, 1
      %p160 = por %p158, %p159
      %p161 = scmp.ne.s32.totalorder %s150, %s151
      %p162 = scmp.eq.s32.totalorder %s27, 0
      %p163 = por %p161, %p162
      %p164 = scmp.ne.s32.totalorder %s150, %s151
      %p165 = scmp.eq.s32.totalorder %s28, 1
      %p166 = por %p164, %p165
      %p168 = scmp.ne.s32.totalorder %s151, %s167
      %p169 = scmp.eq.s32.totalorder %s28, 0
      %p170 = por %p168, %p169
      %s171 = ssub.s32 %s22, %s29
      %p172 = scmp.eq.s32.totalorder %s171, 0
      %s174 = sadd.s32 %s173, 1
      %s175 = scalar_select %p172, %s173, %s174
      %p178 = pneg %p172
      %p179 = scmp.eq.s32.totalorder %s22, 1
      %p180 = por %p178, %p179
      %p181 = scmp.ne.s32.totalorder %s173, %s176
      %p182 = scmp.eq.s32.totalorder %s22, 0
      %p183 = por %p181, %p182
      %p184 = scmp.ne.s32.totalorder %s173, %s176
      %p185 = scmp.eq.s32.totalorder %s27, 1
      %p186 = por %p184, %p185
      %p187 = scmp.ne.s32.totalorder %s176, %s177
      %p188 = scmp.eq.s32.totalorder %s27, 0
      %p189 = por %p187, %p188
      %p190 = scmp.ne.s32.totalorder %s176, %s177
      %p191 = scmp.eq.s32.totalorder %s28, 1
      %p192 = por %p190, %p191
      %p194 = scmp.ne.s32.totalorder %s177, %s193
      %p195 = scmp.eq.s32.totalorder %s28, 0
      %p196 = por %p194, %p195
      %s197 = ssub.s32 %s22, %s29
      %p198 = scmp.eq.s32.totalorder %s197, 0
      %s200 = sadd.s32 %s199, 1
      %s201 = scalar_select %p198, %s199, %s200
      %p204 = pneg %p198
      %p205 = scmp.eq.s32.totalorder %s22, 1
      %p206 = por %p204, %p205
      %p207 = scmp.ne.s32.totalorder %s199, %s202
      %p208 = scmp.eq.s32.totalorder %s22, 0
      %p209 = por %p207, %p208
      %p210 = scmp.ne.s32.totalorder %s199, %s202
      %p211 = scmp.eq.s32.totalorder %s27, 1
      %p212 = por %p210, %p211
      %p213 = scmp.ne.s32.totalorder %s202, %s203
      %p214 = scmp.eq.s32.totalorder %s27, 0
      %p215 = por %p213, %p214
      %p216 = scmp.ne.s32.totalorder %s202, %s203
      %p217 = scmp.eq.s32.totalorder %s28, 1
      %p218 = por %p216, %p217
      %p220 = scmp.ne.s32.totalorder %s203, %s219
      %p221 = scmp.eq.s32.totalorder %s28, 0
      %p222 = por %p220, %p221
      %s223 = ssub.s32 %s22, %s29
      %p224 = scmp.eq.s32.totalorder %s223, 0
      %s226 = sadd.s32 %s225, 1
      %s227 = scalar_select %p224, %s225, %s226
      %p230 = pneg %p224
      %p231 = scmp.eq.s32.totalorder %s22, 1
      %p232 = por %p230, %p231
      %p233 = scmp.ne.s32.totalorder %s225, %s228
      %p234 = scmp.eq.s32.totalorder %s22, 0
      %p235 = por %p233, %p234
      %p236 = scmp.ne.s32.totalorder %s225, %s228
      %p237 = scmp.eq.s32.totalorder %s27, 1
      %p238 = por %p236, %p237
      %p239 = scmp.ne.s32.totalorder %s228, %s229
      %p240 = scmp.eq.s32.totalorder %s27, 0
      %p241 = por %p239, %p240
      %p242 = scmp.ne.s32.totalorder %s228, %s229
      %p243 = scmp.eq.s32.totalorder %s28, 1
      %p244 = por %p242, %p243
      %p246 = scmp.ne.s32.totalorder %s229, %s245
      %p247 = scmp.eq.s32.totalorder %s28, 0
      %p248 = por %p246, %p247
      %s250 = sadd.s32 %s249, 1
      %p253 = scmp.eq.s32.totalorder %s22, 1
      %p254 = scmp.ne.s32.totalorder %s249, %s251
      %p255 = scmp.eq.s32.totalorder %s22, 0
      %p256 = por %p254, %p255
      %p257 = scmp.ne.s32.totalorder %s249, %s251
      %p258 = scmp.eq.s32.totalorder %s27, 1
      %p259 = por %p257, %p258
      %p260 = scmp.ne.s32.totalorder %s251, %s252
      %p261 = scmp.eq.s32.totalorder %s27, 0
      %p262 = por %p260, %p261
      %p263 = scmp.ne.s32.totalorder %s251, %s252
      %p264 = scmp.eq.s32.totalorder %s28, 1
      %p265 = por %p263, %p264
      %p267 = scmp.ne.s32.totalorder %s252, %s266
      %p268 = scmp.eq.s32.totalorder %s28, 0
      %p269 = por %p267, %p268
      %p270 = scmp.le.s32.totalorder 1, %s22
      %p271 = scmp.lt.s32.totalorder %s22, 3
      %p272 = pnand %p270, %p271
      %p273 = pneg %p272
      // Predicated region
      $region9: #{s4_model_forward.1} parent=5 // pred_check
        _
      $region10: #{s4_model_forward.1} parent=5 // pred_check_branch
        %275 = sbr.rel (%p272) target = $region12
      $region11: #{s4_model_forward.1} parent=5 // pred_region
        %s276 = ssub.s32 %s22, 1
        // Predicated region
        $region13: #{s4_model_forward.1} parent=11 // pred_check
          %p277 = pneg %p43
        $region14: #{s4_model_forward.1} parent=11 // pred_check_branch
          %279 = sbr.rel (%p277) target = $region16
        $region15: #{s4_model_forward.1} parent=11 // pred_region
          _
        $region16: #{s4_model_forward.1} parent=11 // pred_fallthru
          _
        // Predicated region
        $region17: #{s4_model_forward.1} parent=11 // pred_check
          %p280 = pneg %p64
        $region18: #{s4_model_forward.1} parent=11 // pred_check_branch
          %282 = sbr.rel (%p280) target = $region20
        $region19: #{s4_model_forward.1} parent=11 // pred_region
          _
        $region20: #{s4_model_forward.1} parent=11 // pred_fallthru
          _
        // Predicated region
        $region21: #{s4_model_forward.1} parent=11 // pred_check
          %p283 = pneg %p85
        $region22: #{s4_model_forward.1} parent=11 // pred_check_branch
          %285 = sbr.rel (%p283) target = $region24
        $region23: #{s4_model_forward.1} parent=11 // pred_region
          %s287 = ssub.s32 16, 16
          %288 = vsyncadd [#allocation4], %s287
          %s290 = sshll.u32 [#allocation3], 4
          %s291 = int_to_ptr.vmem [resolvable:$true] %s290
          %293 = dma.hbm_to_vmem [thread:$0]  %s2, 16, %s291, [#allocation4]
        $region24: #{s4_model_forward.1} parent=11 // pred_fallthru
          _
      $region12: #{s4_model_forward.1} parent=5 // pred_fallthru
        _
      %p294 = scmp.lt.s32.totalorder %s22, 2
      // Predicated region
      $region25: #{s4_model_forward.1} parent=5 // pred_check
        %p295 = pneg %p294
      $region26: #{s4_model_forward.1} parent=5 // pred_check_branch
        %297 = sbr.rel (%p295) target = $region28
      $region27: #{s4_model_forward.1} parent=5 // pred_region
        // Predicated region
        $region29: #{s4_model_forward.1} parent=27 // pred_check
          %p298 = pneg %p105
        $region30: #{s4_model_forward.1} parent=27 // pred_check_branch
          %300 = sbr.rel (%p298) target = $region32
        $region31: #{s4_model_forward.1} parent=27 // pred_region
          %s301 = sand.u32 %s22, 1
          %s302 = scalar_lea.sflag [#allocation6], %s301
          %s303 = sand.u32 %s95, 1
          %s304 = smul.addr %s303, 16
          %s305 = scalar_lea.vmem [#allocation5], %s304
          %s307 = ssub.s32 256, 256
          %308 = vsyncadd %s302, %s307
          %s309 = smul.addr %s22, 2
          %s310 = smul.addr %s309, 128
          %s311 = scalar_lea.hbm %s3, %s310
          %s312 = sshll.u32 %s305, 4
          %s313 = int_to_ptr.vmem [resolvable:$true] %s312
          %318 = dma.hbm_to_vmem [thread:$0]  %s311, 256, %s313, %s302, 128, 128, 8
        $region32: #{s4_model_forward.1} parent=27 // pred_fallthru
          _
        // Predicated region
        $region33: #{s4_model_forward.1} parent=27 // pred_check
          %p319 = pneg %p131
        $region34: #{s4_model_forward.1} parent=27 // pred_check_branch
          %321 = sbr.rel (%p319) target = $region36
        $region35: #{s4_model_forward.1} parent=27 // pred_region
          %s322 = sand.u32 %s22, 1
          %s323 = scalar_lea.sflag [#allocation6], %s322
          %s324 = sand.u32 %s121, 1
          %s325 = scalar_lea.vmem [#allocation7], %s324
          %s327 = ssub.s32 16, 16
          %328 = vsyncadd %s323, %s327
          %s329 = smul.addr %s22, 16
          %s330 = scalar_lea.hbm %s4, %s329
          %s332 = sshll.u32 %s325, 4
          %s333 = int_to_ptr.vmem [resolvable:$true] %s332
          %335 = dma.hbm_to_vmem [thread:$0]  %s330, 16, %s333, %s323
        $region36: #{s4_model_forward.1} parent=27 // pred_fallthru
          _
        // Predicated region
        $region37: #{s4_model_forward.1} parent=27 // pred_check
          %p336 = pneg %p157
        $region38: #{s4_model_forward.1} parent=27 // pred_check_branch
          %338 = sbr.rel (%p336) target = $region40
        $region39: #{s4_model_forward.1} parent=27 // pred_region
          %p339 = scmp.lt.s32.totalorder %s22, 1
          %s340 = scalar_select %p339, %s22, 1
          %s341 = smul.addr %s340, 32
          %s342 = smul.addr %s341, 4
          %s343 = scalar_lea.vmem %s5, %s342
        $region40: #{s4_model_forward.1} parent=27 // pred_fallthru
          _
        // Predicated region
        $region41: #{s4_model_forward.1} parent=27 // pred_check
          %p344 = pneg %p183
        $region42: #{s4_model_forward.1} parent=27 // pred_check_branch
          %346 = sbr.rel (%p344) target = $region44
        $region43: #{s4_model_forward.1} parent=27 // pred_region
          %p347 = scmp.lt.s32.totalorder %s22, 1
          %s348 = scalar_select %p347, %s22, 1
          %s349 = smul.addr %s348, 2
          %s350 = scalar_lea.vmem %s6, %s349
        $region44: #{s4_model_forward.1} parent=27 // pred_fallthru
          _
        // Predicated region
        $region45: #{s4_model_forward.1} parent=27 // pred_check
          %p351 = pneg %p209
        $region46: #{s4_model_forward.1} parent=27 // pred_check_branch
          %353 = sbr.rel (%p351) target = $region48
        $region47: #{s4_model_forward.1} parent=27 // pred_region
          %s354 = sand.u32 %s22, 1
          %s355 = scalar_lea.sflag [#allocation9], %s354
          %s356 = sand.u32 %s199, 1
          %s357 = scalar_lea.vmem [#allocation8], %s356
          %s359 = ssub.s32 16, 16
          %360 = vsyncadd %s355, %s359
          %s361 = smul.addr %s22, 16
          %s362 = scalar_lea.hbm %s7, %s361
          %s364 = sshll.u32 %s357, 4
          %s365 = int_to_ptr.vmem [resolvable:$true] %s364
          %367 = dma.hbm_to_vmem [thread:$0]  %s362, 16, %s365, %s355
        $region48: #{s4_model_forward.1} parent=27 // pred_fallthru
          _
        // Predicated region
        $region49: #{s4_model_forward.1} parent=27 // pred_check
          %p368 = pneg %p235
        $region50: #{s4_model_forward.1} parent=27 // pred_check_branch
          %370 = sbr.rel (%p368) target = $region52
        $region51: #{s4_model_forward.1} parent=27 // pred_region
          %s371 = sand.u32 %s22, 1
          %s372 = scalar_lea.sflag [#allocation9], %s371
          %s373 = sand.u32 %s225, 1
          %s374 = scalar_lea.vmem [#allocation10], %s373
          %s376 = ssub.s32 16, 16
          %377 = vsyncadd %s372, %s376
          %s378 = smul.addr %s22, 16
          %s379 = scalar_lea.hbm %s8, %s378
          %s381 = sshll.u32 %s374, 4
          %s382 = int_to_ptr.vmem [resolvable:$true] %s381
          %384 = dma.hbm_to_vmem [thread:$0]  %s379, 16, %s382, %s372
        $region52: #{s4_model_forward.1} parent=27 // pred_fallthru
          _
      $region28: #{s4_model_forward.1} parent=5 // pred_fallthru
        _
      %p385 = scmp.le.s32.totalorder 1, %s22
      %p386 = scmp.lt.s32.totalorder %s22, 3
      %p387 = pnand %p385, %p386
      %p388 = pneg %p387
      // Predicated region
      $region53: #{s4_model_forward.1} parent=5 // pred_check
        _
      $region54: #{s4_model_forward.1} parent=5 // pred_check_branch
        %390 = sbr.rel (%p387) target = $region56
      $region55: #{s4_model_forward.1} parent=5 // pred_region
        %s391 = ssub.s32 %s22, 1
        // Predicated region
        $region57: #{s4_model_forward.1} parent=55 // pred_check
          %p392 = pneg %p85
        $region58: #{s4_model_forward.1} parent=55 // pred_check_branch
          %394 = sbr.rel (%p392) target = $region60
        $region59: #{s4_model_forward.1} parent=55 // pred_region
          %395 = dma.done [#allocation4], 16
        $region60: #{s4_model_forward.1} parent=55 // pred_fallthru
          _
        %s396 = sand.u32 %s27, 1
        %s397 = scalar_lea.sflag [#allocation6], %s396
        %s398 = sand.u32 %s98, 1
        %s399 = smul.addr %s398, 16
        %s400 = scalar_lea.vmem [#allocation5], %s399
        // Predicated region
        $region61: #{s4_model_forward.1} parent=55 // pred_check
          %p401 = pneg %p111
        $region62: #{s4_model_forward.1} parent=55 // pred_check_branch
          %403 = sbr.rel (%p401) target = $region64
        $region63: #{s4_model_forward.1} parent=55 // pred_region
          %404 = dma.done %s397, 256
        $region64: #{s4_model_forward.1} parent=55 // pred_fallthru
          _
        %s405 = sand.u32 %s27, 1
        %s406 = scalar_lea.sflag [#allocation6], %s405
        %s407 = sand.u32 %s124, 1
        %s408 = scalar_lea.vmem [#allocation7], %s407
        // Predicated region
        $region65: #{s4_model_forward.1} parent=55 // pred_check
          %p409 = pneg %p137
        $region66: #{s4_model_forward.1} parent=55 // pred_check_branch
          %411 = sbr.rel (%p409) target = $region68
        $region67: #{s4_model_forward.1} parent=55 // pred_region
          %412 = dma.done %s406, 16
        $region68: #{s4_model_forward.1} parent=55 // pred_fallthru
          _
        %s413 = sand.u32 %s27, 1
        %s414 = scalar_lea.sflag [#allocation9], %s413
        %s415 = sand.u32 %s202, 1
        %s416 = scalar_lea.vmem [#allocation8], %s415
        // Predicated region
        $region69: #{s4_model_forward.1} parent=55 // pred_check
          %p417 = pneg %p215
        $region70: #{s4_model_forward.1} parent=55 // pred_check_branch
          %419 = sbr.rel (%p417) target = $region72
        $region71: #{s4_model_forward.1} parent=55 // pred_region
          %420 = dma.done %s414, 16
        $region72: #{s4_model_forward.1} parent=55 // pred_fallthru
          _
        %s421 = sand.u32 %s27, 1
        %s422 = scalar_lea.sflag [#allocation9], %s421
        %s423 = sand.u32 %s228, 1
        %s424 = scalar_lea.vmem [#allocation10], %s423
        // Predicated region
        $region73: #{s4_model_forward.1} parent=55 // pred_check
          %p425 = pneg %p241
        $region74: #{s4_model_forward.1} parent=55 // pred_check_branch
          %427 = sbr.rel (%p425) target = $region76
        $region75: #{s4_model_forward.1} parent=55 // pred_region
          %428 = dma.done %s422, 16
        $region76: #{s4_model_forward.1} parent=55 // pred_fallthru
          _
        %p429 = pneg %p43
        %p430 = pneg %p40
        %p431 = pneg %p64
        %p432 = pneg %p61
        %p433 = pneg %p85
        %p434 = pneg %p82
        %s435 = sand.u32 %s27, 1
        %s436 = scalar_lea.sflag [#allocation6], %s435
        %s437 = sand.u32 %s98, 1
        %s438 = smul.addr %s437, 16
        %s439 = scalar_lea.vmem [#allocation5], %s438
        %p440 = pneg %p111
        %p441 = pneg %p108
        %s442 = sand.u32 %s27, 1
        %s443 = scalar_lea.sflag [#allocation6], %s442
        %s444 = sand.u32 %s124, 1
        %s445 = scalar_lea.vmem [#allocation7], %s444
        %p446 = pneg %p137
        %p447 = pneg %p134
        %p448 = scmp.lt.s32.totalorder %s27, 1
        %s449 = scalar_select %p448, %s27, 1
        %s450 = smul.addr %s449, 32
        %s451 = smul.addr %s450, 4
        %s452 = scalar_lea.vmem %s5, %s451
        %p453 = pneg %p163
        %p454 = pneg %p160
        %p455 = scmp.lt.s32.totalorder %s27, 1
        %s456 = scalar_select %p455, %s27, 1
        %s457 = smul.addr %s456, 2
        %s458 = scalar_lea.vmem %s6, %s457
        %p459 = pneg %p189
        %p460 = pneg %p186
        %s461 = sand.u32 %s27, 1
        %s462 = scalar_lea.sflag [#allocation9], %s461
        %s463 = sand.u32 %s202, 1
        %s464 = scalar_lea.vmem [#allocation8], %s463
        %p465 = pneg %p215
        %p466 = pneg %p212
        %s467 = sand.u32 %s27, 1
        %s468 = scalar_lea.sflag [#allocation9], %s467
        %s469 = sand.u32 %s228, 1
        %s470 = scalar_lea.vmem [#allocation10], %s469
        %p471 = pneg %p241
        %p472 = pneg %p238
        %p473 = pneg %p262
        %p474 = pneg %p259
        %p475 = scmp.lt.s32.totalorder %s27, 1
        %s476 = scalar_select %p475, %s27, 1
        %s477 = smul.addr %s476, 32
        %s478 = smul.addr %s477, 4
        %s479 = scalar_lea.vmem %s5, %s478
        %p480 = scmp.lt.s32.totalorder %s27, 1
        %s481 = scalar_select %p480, %s27, 1
        %s482 = smul.addr %s481, 2
        %s483 = scalar_lea.vmem %s6, %s482
        %p485 = scmp.eq.s32.totalorder %s27, 0
        // Predicated region
        $region77: #{s4_model_forward.1} parent=55 // pred_check
          %p486 = pneg %p485
        $region78: #{s4_model_forward.1} parent=55 // pred_check_branch
          %488 = sbr.rel (%p486) target = $region80
        $region79: #{s4_model_forward.1} parent=55 // pred_region
          %v489 = vld [vmem:[%s0] sm:$0xff]
          %v490 = vld [vmem:[%s0 + $0x8] sm:$0xff]
          %v491 = vld [vmem:[%s0 + $0x10] sm:$0xff]
          %v492 = vld [vmem:[%s0 + $0x18] sm:$0xff]
          %v493 = vld [vmem:[%s1] sm:$0xff]
          %v494 = vld [vmem:[%s1 + $0x8] sm:$0xff]
          %v495 = vld [vmem:[#allocation3] sm:$0x1]
          %v497 = vlaneseq
          %v498 = vshrl.u32 %v497, 7
          %v499 = vsub.s32 0, %v498
          %v500 = vrot.slane %v495, %v499
          %vm502 = vcmask 130048
          %v504 = vsel %vm502, %v489, 0
          %v507 = vsel %vm502, %v490, 0
          %v510 = vsel %vm502, %v491, 0
          %v513 = vsel %vm502, %v492, 0
          %515 = vmatprep.subr.mxu0 0.0
          %516 = vmatpush1.msra.mxu0 0.0
          %517 = vmatprep.subr.mxu0 0.0
          %518 = vmatpush1.msra.mxu0 0.0
          %519 = vmatprep.subr.mxu0 0.0
          %520 = vmatpush1.msra.mxu0 0.0
          %521 = vmatprep.subr.mxu0 0.0
          %522 = vmatpush1.msra.mxu0 0.0
          %523 = vmatprep.subr.mxu0 0.0
          %524 = vmatpush1.msra.mxu0 0.0
          %525 = vmatprep.subr.mxu0 0.0
          %526 = vmatpush1.msra.mxu0 0.0
          %527 = vmatprep.subr.mxu0 0.0
          %528 = vmatpush1.msra.mxu0 0.0
          %529 = vmatprep.subr.mxu0 0.0
          %530 = vmatpush1.msra.mxu0 0.0
          %531 = vmatprep.subr.mxu0 0.0
          %532 = vmatpush1.msra.mxu0 0.0
          %533 = vmatprep.subr.mxu0 0.0
          %534 = vmatpush1.msra.mxu0 0.0
          %535 = vmatprep.subr.mxu0 0.0
          %536 = vmatpush1.msra.mxu0 0.0
          %537 = vmatprep.subr.mxu0 0.0
          %538 = vmatpush1.msra.mxu0 0.0
          %539 = vmatprep.subr.mxu0 0.0
          %540 = vmatpush1.msra.mxu0 0.0
          %541 = vmatprep.subr.mxu0 0.0
          %542 = vmatpush1.msra.mxu0 0.0
          %543 = vmatprep.subr.mxu0 0.0
          %544 = vmatpush1.msra.mxu0 %v494
          %545 = vmatprep.subr.mxu0 0.0
          %546 = vmatpush1.msra.mxu0 %v493
          %547 = vmatprep.subr.mxu0 0.0
          %548 = vmatpush2.msra.mxu0 0.0
          %549 = vmatprep.subr.mxu0 0.0
          %550 = vmatpush2.msra.mxu0 0.0
          %551 = vmatprep.subr.mxu0 0.0
          %552 = vmatpush2.msra.mxu0 0.0
          %553 = vmatprep.subr.mxu0 0.0
          %554 = vmatpush2.msra.mxu0 0.0
          %555 = vmatprep.subr.mxu0 0.0
          %556 = vmatpush2.msra.mxu0 0.0
          %557 = vmatprep.subr.mxu0 0.0
          %558 = vmatpush2.msra.mxu0 0.0
          %559 = vmatprep.subr.mxu0 0.0
          %560 = vmatpush2.msra.mxu0 0.0
          %561 = vmatprep.subr.mxu0 0.0
          %562 = vmatpush2.msra.mxu0 0.0
          %563 = vmatprep.subr.mxu0 0.0
          %564 = vmatpush2.msra.mxu0 0.0
          %565 = vmatprep.subr.mxu0 0.0
          %566 = vmatpush2.msra.mxu0 0.0
          %567 = vmatprep.subr.mxu0 0.0
          %568 = vmatpush2.msra.mxu0 0.0
          %569 = vmatprep.subr.mxu0 0.0
          %570 = vmatpush2.msra.mxu0 0.0
          %571 = vmatprep.subr.mxu0 0.0
          %572 = vmatpush2.msra.mxu0 0.0
          %573 = vmatprep.subr.mxu0 0.0
          %574 = vmatpush2.msra.mxu0 0.0
          %575 = vmatprep.subr.mxu0 0.0
          %576 = vmatpush2.msra.mxu0 0.0
          %577 = vmatprep.subr.mxu0 0.0
          %578 = vmatpush2.msra.mxu0 0.0
          %579 = vmatprep.mubr.f32.mxu0 0.0
          %580 = vmatmul.mubr.f32.gmra.mxu0 %v504
          %v581 = vpop.f32.mrf.mxu0
          %v582 = vadd.f32 %v500, %v581
          %v583 = vpop.f32.mrf.mxu0
          %584 = vmatprep.mubr.f32.mxu0 0.0
          %585 = vmatmul.mubr.f32.gmra.mxu0 %v507
          %v586 = vpop.f32.mrf.mxu0
          %v587 = vadd.f32 %v500, %v586
          %v588 = vpop.f32.mrf.mxu0
          %589 = vmatprep.mubr.f32.mxu0 0.0
          %590 = vmatmul.mubr.f32.gmra.mxu0 %v510
          %v591 = vpop.f32.mrf.mxu0
          %v592 = vadd.f32 %v500, %v591
          %v593 = vpop.f32.mrf.mxu0
          %594 = vmatprep.mubr.f32.mxu0 0.0
          %595 = vmatmul.mubr.f32.gmra.mxu0 %v513
          %v596 = vpop.f32.mrf.mxu0
          %v597 = vadd.f32 %v500, %v596
          %v598 = vpop.f32.mrf.mxu0
          %599 = vdwg.mxu0
          %600 = vst [vmem:[#allocation2] sm:$0xff] %v582
          %601 = vst [vmem:[#allocation2 + $0x8] sm:$0xff] %v587
          %602 = vst [vmem:[#allocation2 + $0x10] sm:$0xff] %v592
          %603 = vst [vmem:[#allocation2 + $0x18] sm:$0xff] %v597
        $region80: #{s4_model_forward.1} parent=55 // pred_fallthru
          _
        %v604 = vld [vmem:[#allocation2] sm:$0xff]
        %v605 = vld [vmem:[#allocation2 + $0x8] sm:$0xff]
        %v606 = vld [vmem:[#allocation2 + $0x10] sm:$0xff]
        %v607 = vld [vmem:[#allocation2 + $0x18] sm:$0xff]
        %v608 = vld [vmem:[%s400] sm:$0xff]
        %v609 = vld [vmem:[%s400 + $0x8] sm:$0xff]
        %v610 = vlaneseq
        %v611 = vshrl.u32 %v610, 7
        %v612 = vadd.s32 %v611, 8
        %v613 = vadd.s32 %v611, 16
        %v614 = vadd.s32 %v611, 24
        %vm615 = vcmp.lt.s32.totalorder %v611, 0
        %v616 = vsub.s32 0, %v611
        %v617 = vsel %vm615, %v616, %v611
        %v618 = vshrl.u32 %v617, 4
        %v619 = vand.u32 %v617, 15
        %v620 = vsub.s32 0, %v619
        %v621 = vsel %vm615, %v620, %v619
        %vm622 = vcmp.lt.s32.totalorder %v612, 0
        %v623 = vsub.s32 0, %v612
        %v624 = vsel %vm622, %v623, %v612
        %v625 = vshrl.u32 %v624, 4
        %v626 = vand.u32 %v624, 15
        %v627 = vsub.s32 0, %v626
        %v628 = vsel %vm622, %v627, %v626
        %vm629 = vcmp.lt.s32.totalorder %v613, 0
        %v630 = vsub.s32 0, %v613
        %v631 = vsel %vm629, %v630, %v613
        %v632 = vshrl.u32 %v631, 4
        %v633 = vand.u32 %v631, 15
        %v634 = vsub.s32 0, %v633
        %v635 = vsel %vm629, %v634, %v633
        %vm636 = vcmp.lt.s32.totalorder %v614, 0
        %v637 = vsub.s32 0, %v614
        %v638 = vsel %vm636, %v637, %v614
        %v639 = vshrl.u32 %v638, 4
        %v640 = vand.u32 %v638, 15
        %v641 = vsub.s32 0, %v640
        %v642 = vsel %vm636, %v641, %v640
        %vm643 = vcmp.ne.s32.totalorder %v621, 0
        %vm644 = vcmp.ne.s32.totalorder %v628, 0
        %vm645 = vcmp.ne.s32.totalorder %v635, 0
        %vm646 = vcmp.ne.s32.totalorder %v642, 0
        %vm647 = vcmp.lt.s32.totalorder %v621, 0
        %vm648 = vcmp.lt.s32.totalorder %v628, 0
        %vm649 = vcmp.lt.s32.totalorder %v635, 0
        %vm650 = vcmp.lt.s32.totalorder %v642, 0
        %vm651 = vmand %vm647, %vm643
        %vm652 = vmand %vm648, %vm644
        %vm653 = vmand %vm649, %vm645
        %vm654 = vmand %vm650, %vm646
        %v655 = vadd.s32 %v621, 16
        %v656 = vadd.s32 %v628, 16
        %v657 = vadd.s32 %v635, 16
        %v658 = vadd.s32 %v642, 16
        %v659 = vsel %vm651, %v655, %v621
        %v660 = vsel %vm652, %v656, %v628
        %v661 = vsel %vm653, %v657, %v635
        %v662 = vsel %vm654, %v658, %v642
        %v663 = vlaneseq
        %v664 = vshrl.u32 %v663, 7
        %v665 = vsub.s32 0, %v664
        %v666 = vrot.slane %v608, %v665
        %v667 = vmul.f32 %v604, %v666
        %v668 = vmul.f32 %v605, %v666
        %v669 = vmul.f32 %v606, %v666
        %v670 = vmul.f32 %v607, %v666
        %v671 = vrot.slane %v604, 7
        %v672 = vrot.slane %v605, 7
        %v673 = vrot.slane %v606, 7
        %v674 = vrot.slane %v607, 7
        %vm675 = vcmp.lt.s32.totalorder %v611, 1
        %v676 = vsel %vm675, %v673, %v674
        %v677 = vsel %vm675, %v672, %v673
        %v678 = vsel %vm675, %v671, %v672
        %v679 = vsel %vm675, %v674, %v671
        %vm680 = vcmp.ge.s32.totalorder %v659, 1
        %vm681 = vcmp.ge.s32.totalorder %v660, 1
        %vm682 = vcmp.ge.s32.totalorder %v661, 1
        %vm683 = vcmp.ge.s32.totalorder %v662, 1
        %v684 = vsel %vm680, 1, 0
        %v685 = vsel %vm681, 1, 0
        %v686 = vsel %vm682, 1, 0
        %v687 = vsel %vm683, 1, 0
        %vm688 = vcmp.eq.s32.totalorder %v684, 1
        %vm689 = vcmp.eq.s32.totalorder %v685, 1
        %vm690 = vcmp.eq.s32.totalorder %v686, 1
        %vm691 = vcmp.eq.s32.totalorder %v687, 1
        %v692 = vsel %vm688, %v679, 0.0
        %v693 = vsel %vm689, %v678, 0.0
        %v694 = vsel %vm690, %v677, 0.0
        %v695 = vsel %vm691, %v676, 0.0
        %v696 = vlaneseq
        %v697 = vshrl.u32 %v696, 7
        %v698 = vsub.s32 1, %v697
        %v699 = vrot.slane %v608, %v698
        %v700 = vmul.f32 %v692, %v699
        %v701 = vmul.f32 %v693, %v699
        %v702 = vmul.f32 %v694, %v699
        %v703 = vmul.f32 %v695, %v699
        %v704 = vadd.f32 %v667, %v700
        %v705 = vadd.f32 %v668, %v701
        %v706 = vadd.f32 %v669, %v702
        %v707 = vadd.f32 %v670, %v703
        %v708 = vrot.slane %v604, 6
        %v709 = vrot.slane %v605, 6
        %v710 = vrot.slane %v606, 6
        %v711 = vrot.slane %v607, 6
        %vm712 = vcmp.lt.s32.totalorder %v611, 2
        %v713 = vsel %vm712, %v710, %v711
        %v714 = vsel %vm712, %v709, %v710
        %v715 = vsel %vm712, %v708, %v709
        %v716 = vsel %vm712, %v711, %v708
        %vm717 = vcmp.ge.s32.totalorder %v659, 2
        %vm718 = vcmp.ge.s32.totalorder %v660, 2
        %vm719 = vcmp.ge.s32.totalorder %v661, 2
        %vm720 = vcmp.ge.s32.totalorder %v662, 2
        %v721 = vsel %vm717, 1, 0
        %v722 = vsel %vm718, 1, 0
        %v723 = vsel %vm719, 1, 0
        %v724 = vsel %vm720, 1, 0
        %vm725 = vcmp.eq.s32.totalorder %v721, 1
        %vm726 = vcmp.eq.s32.totalorder %v722, 1
        %vm727 = vcmp.eq.s32.totalorder %v723, 1
        %vm728 = vcmp.eq.s32.totalorder %v724, 1
        %v729 = vsel %vm725, %v716, 0.0
        %v730 = vsel %vm726, %v715, 0.0
        %v731 = vsel %vm727, %v714, 0.0
        %v732 = vsel %vm728, %v713, 0.0
        %v733 = vlaneseq
        %v734 = vshrl.u32 %v733, 7
        %v735 = vsub.s32 2, %v734
        %v736 = vrot.slane %v608, %v735
        %v737 = vmul.f32 %v729, %v736
        %v738 = vmul.f32 %v730, %v736
        %v739 = vmul.f32 %v731, %v736
        %v740 = vmul.f32 %v732, %v736
        %v741 = vadd.f32 %v704, %v737
        %v742 = vadd.f32 %v705, %v738
        %v743 = vadd.f32 %v706, %v739
        %v744 = vadd.f32 %v707, %v740
        %v745 = vrot.slane %v604, 5
        %v746 = vrot.slane %v605, 5
        %v747 = vrot.slane %v606, 5
        %v748 = vrot.slane %v607, 5
        %vm749 = vcmp.lt.s32.totalorder %v611, 3
        %v750 = vsel %vm749, %v747, %v748
        %v751 = vsel %vm749, %v746, %v747
        %v752 = vsel %vm749, %v745, %v746
        %v753 = vsel %vm749, %v748, %v745
        %vm754 = vcmp.ge.s32.totalorder %v659, 3
        %vm755 = vcmp.ge.s32.totalorder %v660, 3
        %vm756 = vcmp.ge.s32.totalorder %v661, 3
        %vm757 = vcmp.ge.s32.totalorder %v662, 3
        %v758 = vsel %vm754, 1, 0
        %v759 = vsel %vm755, 1, 0
        %v760 = vsel %vm756, 1, 0
        %v761 = vsel %vm757, 1, 0
        %vm762 = vcmp.eq.s32.totalorder %v758, 1
        %vm763 = vcmp.eq.s32.totalorder %v759, 1
        %vm764 = vcmp.eq.s32.totalorder %v760, 1
        %vm765 = vcmp.eq.s32.totalorder %v761, 1
        %v766 = vsel %vm762, %v753, 0.0
        %v767 = vsel %vm763, %v752, 0.0
        %v768 = vsel %vm764, %v751, 0.0
        %v769 = vsel %vm765, %v750, 0.0
        %v770 = vlaneseq
        %v771 = vshrl.u32 %v770, 7
        %v772 = vsub.s32 3, %v771
        %v773 = vrot.slane %v608, %v772
        %v774 = vmul.f32 %v766, %v773
        %v775 = vmul.f32 %v767, %v773
        %v776 = vmul.f32 %v768, %v773
        %v777 = vmul.f32 %v769, %v773
        %v778 = vadd.f32 %v741, %v774
        %v779 = vadd.f32 %v742, %v775
        %v780 = vadd.f32 %v743, %v776
        %v781 = vadd.f32 %v744, %v777
        %v782 = vrot.slane %v604, 4
        %v783 = vrot.slane %v605, 4
        %v784 = vrot.slane %v606, 4
        %v785 = vrot.slane %v607, 4
        %vm786 = vcmp.lt.s32.totalorder %v611, 4
        %v787 = vsel %vm786, %v784, %v785
        %v788 = vsel %vm786, %v783, %v784
        %v789 = vsel %vm786, %v782, %v783
        %v790 = vsel %vm786, %v785, %v782
        %vm791 = vcmp.ge.s32.totalorder %v659, 4
        %vm792 = vcmp.ge.s32.totalorder %v660, 4
        %vm793 = vcmp.ge.s32.totalorder %v661, 4
        %vm794 = vcmp.ge.s32.totalorder %v662, 4
        %v795 = vsel %vm791, 1, 0
        %v796 = vsel %vm792, 1, 0
        %v797 = vsel %vm793, 1, 0
        %v798 = vsel %vm794, 1, 0
        %vm799 = vcmp.eq.s32.totalorder %v795, 1
        %vm800 = vcmp.eq.s32.totalorder %v796, 1
        %vm801 = vcmp.eq.s32.totalorder %v797, 1
        %vm802 = vcmp.eq.s32.totalorder %v798, 1
        %v803 = vsel %vm799, %v790, 0.0
        %v804 = vsel %vm800, %v789, 0.0
        %v805 = vsel %vm801, %v788, 0.0
        %v806 = vsel %vm802, %v787, 0.0
        %v807 = vlaneseq
        %v808 = vshrl.u32 %v807, 7
        %v809 = vsub.s32 4, %v808
        %v810 = vrot.slane %v608, %v809
        %v811 = vmul.f32 %v803, %v810
        %v812 = vmul.f32 %v804, %v810
        %v813 = vmul.f32 %v805, %v810
        %v814 = vmul.f32 %v806, %v810
        %v815 = vadd.f32 %v778, %v811
        %v816 = vadd.f32 %v779, %v812
        %v817 = vadd.f32 %v780, %v813
        %v818 = vadd.f32 %v781, %v814
        %v819 = vrot.slane %v604, 3
        %v820 = vrot.slane %v605, 3
        %v821 = vrot.slane %v606, 3
        %v822 = vrot.slane %v607, 3
        %vm823 = vcmp.lt.s32.totalorder %v611, 5
        %v824 = vsel %vm823, %v821, %v822
        %v825 = vsel %vm823, %v820, %v821
        %v826 = vsel %vm823, %v819, %v820
        %v827 = vsel %vm823, %v822, %v819
        %vm828 = vcmp.ge.s32.totalorder %v659, 5
        %vm829 = vcmp.ge.s32.totalorder %v660, 5
        %vm830 = vcmp.ge.s32.totalorder %v661, 5
        %vm831 = vcmp.ge.s32.totalorder %v662, 5
        %v832 = vsel %vm828, 1, 0
        %v833 = vsel %vm829, 1, 0
        %v834 = vsel %vm830, 1, 0
        %v835 = vsel %vm831, 1, 0
        %vm836 = vcmp.eq.s32.totalorder %v832, 1
        %vm837 = vcmp.eq.s32.totalorder %v833, 1
        %vm838 = vcmp.eq.s32.totalorder %v834, 1
        %vm839 = vcmp.eq.s32.totalorder %v835, 1
        %v840 = vsel %vm836, %v827, 0.0
        %v841 = vsel %vm837, %v826, 0.0
        %v842 = vsel %vm838, %v825, 0.0
        %v843 = vsel %vm839, %v824, 0.0
        %v844 = vlaneseq
        %v845 = vshrl.u32 %v844, 7
        %v846 = vsub.s32 5, %v845
        %v847 = vrot.slane %v608, %v846
        %v848 = vmul.f32 %v840, %v847
        %v849 = vmul.f32 %v841, %v847
        %v850 = vmul.f32 %v842, %v847
        %v851 = vmul.f32 %v843, %v847
        %v852 = vadd.f32 %v815, %v848
        %v853 = vadd.f32 %v816, %v849
        %v854 = vadd.f32 %v817, %v850
        %v855 = vadd.f32 %v818, %v851
        %v856 = vrot.slane %v604, 2
        %v857 = vrot.slane %v605, 2
        %v858 = vrot.slane %v606, 2
        %v859 = vrot.slane %v607, 2
        %vm860 = vcmp.lt.s32.totalorder %v611, 6
        %v861 = vsel %vm860, %v858, %v859
        %v862 = vsel %vm860, %v857, %v858
        %v863 = vsel %vm860, %v856, %v857
        %v864 = vsel %vm860, %v859, %v856
        %vm865 = vcmp.ge.s32.totalorder %v659, 6
        %vm866 = vcmp.ge.s32.totalorder %v660, 6
        %vm867 = vcmp.ge.s32.totalorder %v661, 6
        %vm868 = vcmp.ge.s32.totalorder %v662, 6
        %v869 = vsel %vm865, 1, 0
        %v870 = vsel %vm866, 1, 0
        %v871 = vsel %vm867, 1, 0
        %v872 = vsel %vm868, 1, 0
        %vm873 = vcmp.eq.s32.totalorder %v869, 1
        %vm874 = vcmp.eq.s32.totalorder %v870, 1
        %vm875 = vcmp.eq.s32.totalorder %v871, 1
        %vm876 = vcmp.eq.s32.totalorder %v872, 1
        %v877 = vsel %vm873, %v864, 0.0
        %v878 = vsel %vm874, %v863, 0.0
        %v879 = vsel %vm875, %v862, 0.0
        %v880 = vsel %vm876, %v861, 0.0
        %v881 = vlaneseq
        %v882 = vshrl.u32 %v881, 7
        %v883 = vsub.s32 6, %v882
        %v884 = vrot.slane %v608, %v883
        %v885 = vmul.f32 %v877, %v884
        %v886 = vmul.f32 %v878, %v884
        %v887 = vmul.f32 %v879, %v884
        %v888 = vmul.f32 %v880, %v884
        %v889 = vadd.f32 %v852, %v885
        %v890 = vadd.f32 %v853, %v886
        %v891 = vadd.f32 %v854, %v887
        %v892 = vadd.f32 %v855, %v888
        %v893 = vrot.slane %v604, 1
        %v894 = vrot.slane %v605, 1
        %v895 = vrot.slane %v606, 1
        %v896 = vrot.slane %v607, 1
        %vm897 = vcmp.lt.s32.totalorder %v611, 7
        %v898 = vsel %vm897, %v895, %v896
        %v899 = vsel %vm897, %v894, %v895
        %v900 = vsel %vm897, %v893, %v894
        %v901 = vsel %vm897, %v896, %v893
        %vm902 = vcmp.ge.s32.totalorder %v659, 7
        %vm903 = vcmp.ge.s32.totalorder %v660, 7
        %vm904 = vcmp.ge.s32.totalorder %v661, 7
        %vm905 = vcmp.ge.s32.totalorder %v662, 7
        %v906 = vsel %vm902, 1, 0
        %v907 = vsel %vm903, 1, 0
        %v908 = vsel %vm904, 1, 0
        %v909 = vsel %vm905, 1, 0
        %vm910 = vcmp.eq.s32.totalorder %v906, 1
        %vm911 = vcmp.eq.s32.totalorder %v907, 1
        %vm912 = vcmp.eq.s32.totalorder %v908, 1
        %vm913 = vcmp.eq.s32.totalorder %v909, 1
        %v914 = vsel %vm910, %v901, 0.0
        %v915 = vsel %vm911, %v900, 0.0
        %v916 = vsel %vm912, %v899, 0.0
        %v917 = vsel %vm913, %v898, 0.0
        %v918 = vlaneseq
        %v919 = vshrl.u32 %v918, 7
        %v920 = vsub.s32 7, %v919
        %v921 = vrot.slane %v608, %v920
        %v922 = vmul.f32 %v914, %v921
        %v923 = vmul.f32 %v915, %v921
        %v924 = vmul.f32 %v916, %v921
        %v925 = vmul.f32 %v917, %v921
        %v926 = vadd.f32 %v889, %v922
        %v927 = vadd.f32 %v890, %v923
        %v928 = vadd.f32 %v891, %v924
        %v929 = vadd.f32 %v892, %v925
        %vm930 = vcmp.ge.s32.totalorder %v659, 8
        %vm931 = vcmp.ge.s32.totalorder %v660, 8
        %vm932 = vcmp.ge.s32.totalorder %v661, 8
        %vm933 = vcmp.ge.s32.totalorder %v662, 8
        %v934 = vsel %vm930, 1, 0
        %v935 = vsel %vm931, 1, 0
        %v936 = vsel %vm932, 1, 0
        %v937 = vsel %vm933, 1, 0
        %vm938 = vcmp.eq.s32.totalorder %v934, 1
        %vm939 = vcmp.eq.s32.totalorder %v935, 1
        %vm940 = vcmp.eq.s32.totalorder %v936, 1
        %vm941 = vcmp.eq.s32.totalorder %v937, 1
        %v942 = vsel %vm938, %v607, 0.0
        %v943 = vsel %vm939, %v604, 0.0
        %v944 = vsel %vm940, %v605, 0.0
        %v945 = vsel %vm941, %v606, 0.0
        %v946 = vlaneseq
        %v947 = vshrl.u32 %v946, 7
        %v948 = vsub.s32 0, %v947
        %v949 = vrot.slane %v609, %v948
        %v950 = vmul.f32 %v942, %v949
        %v951 = vmul.f32 %v943, %v949
        %v952 = vmul.f32 %v944, %v949
        %v953 = vmul.f32 %v945, %v949
        %v954 = vadd.f32 %v926, %v950
        %v955 = vadd.f32 %v927, %v951
        %v956 = vadd.f32 %v928, %v952
        %v957 = vadd.f32 %v929, %v953
        %vm958 = vcmp.ge.s32.totalorder %v659, 9
        %vm959 = vcmp.ge.s32.totalorder %v660, 9
        %vm960 = vcmp.ge.s32.totalorder %v661, 9
        %vm961 = vcmp.ge.s32.totalorder %v662, 9
        %v962 = vsel %vm958, 1, 0
        %v963 = vsel %vm959, 1, 0
        %v964 = vsel %vm960, 1, 0
        %v965 = vsel %vm961, 1, 0
        %vm966 = vcmp.eq.s32.totalorder %v962, 1
        %vm967 = vcmp.eq.s32.totalorder %v963, 1
        %vm968 = vcmp.eq.s32.totalorder %v964, 1
        %vm969 = vcmp.eq.s32.totalorder %v965, 1
        %v970 = vsel %vm966, %v676, 0.0
        %v971 = vsel %vm967, %v679, 0.0
        %v972 = vsel %vm968, %v678, 0.0
        %v973 = vsel %vm969, %v677, 0.0
        %v974 = vlaneseq
        %v975 = vshrl.u32 %v974, 7
        %v976 = vsub.s32 1, %v975
        %v977 = vrot.slane %v609, %v976
        %v978 = vmul.f32 %v970, %v977
        %v979 = vmul.f32 %v971, %v977
        %v980 = vmul.f32 %v972, %v977
        %v981 = vmul.f32 %v973, %v977
        %v982 = vadd.f32 %v954, %v978
        %v983 = vadd.f32 %v955, %v979
        %v984 = vadd.f32 %v956, %v980
        %v985 = vadd.f32 %v957, %v981
        %vm986 = vcmp.ge.s32.totalorder %v659, 10
        %vm987 = vcmp.ge.s32.totalorder %v660, 10
        %vm988 = vcmp.ge.s32.totalorder %v661, 10
        %vm989 = vcmp.ge.s32.totalorder %v662, 10
        %v990 = vsel %vm986, 1, 0
        %v991 = vsel %vm987, 1, 0
        %v992 = vsel %vm988, 1, 0
        %v993 = vsel %vm989, 1, 0
        %vm994 = vcmp.eq.s32.totalorder %v990, 1
        %vm995 = vcmp.eq.s32.totalorder %v991, 1
        %vm996 = vcmp.eq.s32.totalorder %v992, 1
        %vm997 = vcmp.eq.s32.totalorder %v993, 1
        %v998 = vsel %vm994, %v713, 0.0
        %v999 = vsel %vm995, %v716, 0.0
        %v1000 = vsel %vm996, %v715, 0.0
        %v1001 = vsel %vm997, %v714, 0.0
        %v1002 = vlaneseq
        %v1003 = vshrl.u32 %v1002, 7
        %v1004 = vsub.s32 2, %v1003
        %v1005 = vrot.slane %v609, %v1004
        %v1006 = vmul.f32 %v998, %v1005
        %v1007 = vmul.f32 %v999, %v1005
        %v1008 = vmul.f32 %v1000, %v1005
        %v1009 = vmul.f32 %v1001, %v1005
        %v1010 = vadd.f32 %v982, %v1006
        %v1011 = vadd.f32 %v983, %v1007
        %v1012 = vadd.f32 %v984, %v1008
        %v1013 = vadd.f32 %v985, %v1009
        %vm1014 = vcmp.ge.s32.totalorder %v659, 11
        %vm1015 = vcmp.ge.s32.totalorder %v660, 11
        %vm1016 = vcmp.ge.s32.totalorder %v661, 11
        %vm1017 = vcmp.ge.s32.totalorder %v662, 11
        %v1018 = vsel %vm1014, 1, 0
        %v1019 = vsel %vm1015, 1, 0
        %v1020 = vsel %vm1016, 1, 0
        %v1021 = vsel %vm1017, 1, 0
        %vm1022 = vcmp.eq.s32.totalorder %v1018, 1
        %vm1023 = vcmp.eq.s32.totalorder %v1019, 1
        %vm1024 = vcmp.eq.s32.totalorder %v1020, 1
        %vm1025 = vcmp.eq.s32.totalorder %v1021, 1
        %v1026 = vsel %vm1022, %v750, 0.0
        %v1027 = vsel %vm1023, %v753, 0.0
        %v1028 = vsel %vm1024, %v752, 0.0
        %v1029 = vsel %vm1025, %v751, 0.0
        %v1030 = vlaneseq
        %v1031 = vshrl.u32 %v1030, 7
        %v1032 = vsub.s32 3, %v1031
        %v1033 = vrot.slane %v609, %v1032
        %v1034 = vmul.f32 %v1026, %v1033
        %v1035 = vmul.f32 %v1027, %v1033
        %v1036 = vmul.f32 %v1028, %v1033
        %v1037 = vmul.f32 %v1029, %v1033
        %v1038 = vadd.f32 %v1010, %v1034
        %v1039 = vadd.f32 %v1011, %v1035
        %v1040 = vadd.f32 %v1012, %v1036
        %v1041 = vadd.f32 %v1013, %v1037
        %vm1042 = vcmp.ge.s32.totalorder %v659, 12
        %vm1043 = vcmp.ge.s32.totalorder %v660, 12
        %vm1044 = vcmp.ge.s32.totalorder %v661, 12
        %vm1045 = vcmp.ge.s32.totalorder %v662, 12
        %v1046 = vsel %vm1042, 1, 0
        %v1047 = vsel %vm1043, 1, 0
        %v1048 = vsel %vm1044, 1, 0
        %v1049 = vsel %vm1045, 1, 0
        %vm1050 = vcmp.eq.s32.totalorder %v1046, 1
        %vm1051 = vcmp.eq.s32.totalorder %v1047, 1
        %vm1052 = vcmp.eq.s32.totalorder %v1048, 1
        %vm1053 = vcmp.eq.s32.totalorder %v1049, 1
        %v1054 = vsel %vm1050, %v787, 0.0
        %v1055 = vsel %vm1051, %v790, 0.0
        %v1056 = vsel %vm1052, %v789, 0.0
        %v1057 = vsel %vm1053, %v788, 0.0
        %v1058 = vlaneseq
        %v1059 = vshrl.u32 %v1058, 7
        %v1060 = vsub.s32 4, %v1059
        %v1061 = vrot.slane %v609, %v1060
        %v1062 = vmul.f32 %v1054, %v1061
        %v1063 = vmul.f32 %v1055, %v1061
        %v1064 = vmul.f32 %v1056, %v1061
        %v1065 = vmul.f32 %v1057, %v1061
        %v1066 = vadd.f32 %v1038, %v1062
        %v1067 = vadd.f32 %v1039, %v1063
        %v1068 = vadd.f32 %v1040, %v1064
        %v1069 = vadd.f32 %v1041, %v1065
        %vm1070 = vcmp.ge.s32.totalorder %v659, 13
        %vm1071 = vcmp.ge.s32.totalorder %v660, 13
        %vm1072 = vcmp.ge.s32.totalorder %v661, 13
        %vm1073 = vcmp.ge.s32.totalorder %v662, 13
        %v1074 = vsel %vm1070, 1, 0
        %v1075 = vsel %vm1071, 1, 0
        %v1076 = vsel %vm1072, 1, 0
        %v1077 = vsel %vm1073, 1, 0
        %vm1078 = vcmp.eq.s32.totalorder %v1074, 1
        %vm1079 = vcmp.eq.s32.totalorder %v1075, 1
        %vm1080 = vcmp.eq.s32.totalorder %v1076, 1
        %vm1081 = vcmp.eq.s32.totalorder %v1077, 1
        %v1082 = vsel %vm1078, %v824, 0.0
        %v1083 = vsel %vm1079, %v827, 0.0
        %v1084 = vsel %vm1080, %v826, 0.0
        %v1085 = vsel %vm1081, %v825, 0.0
        %v1086 = vlaneseq
        %v1087 = vshrl.u32 %v1086, 7
        %v1088 = vsub.s32 5, %v1087
        %v1089 = vrot.slane %v609, %v1088
        %v1090 = vmul.f32 %v1082, %v1089
        %v1091 = vmul.f32 %v1083, %v1089
        %v1092 = vmul.f32 %v1084, %v1089
        %v1093 = vmul.f32 %v1085, %v1089
        %v1094 = vadd.f32 %v1066, %v1090
        %v1095 = vadd.f32 %v1067, %v1091
        %v1096 = vadd.f32 %v1068, %v1092
        %v1097 = vadd.f32 %v1069, %v1093
        %vm1098 = vcmp.ge.s32.totalorder %v659, 14
        %vm1099 = vcmp.ge.s32.totalorder %v660, 14
        %vm1100 = vcmp.ge.s32.totalorder %v661, 14
        %vm1101 = vcmp.ge.s32.totalorder %v662, 14
        %v1102 = vsel %vm1098, 1, 0
        %v1103 = vsel %vm1099, 1, 0
        %v1104 = vsel %vm1100, 1, 0
        %v1105 = vsel %vm1101, 1, 0
        %vm1106 = vcmp.eq.s32.totalorder %v1102, 1
        %vm1107 = vcmp.eq.s32.totalorder %v1103, 1
        %vm1108 = vcmp.eq.s32.totalorder %v1104, 1
        %vm1109 = vcmp.eq.s32.totalorder %v1105, 1
        %v1110 = vsel %vm1106, %v861, 0.0
        %v1111 = vsel %vm1107, %v864, 0.0
        %v1112 = vsel %vm1108, %v863, 0.0
        %v1113 = vsel %vm1109, %v862, 0.0
        %v1114 = vlaneseq
        %v1115 = vshrl.u32 %v1114, 7
        %v1116 = vsub.s32 6, %v1115
        %v1117 = vrot.slane %v609, %v1116
        %v1118 = vmul.f32 %v1110, %v1117
        %v1119 = vmul.f32 %v1111, %v1117
        %v1120 = vmul.f32 %v1112, %v1117
        %v1121 = vmul.f32 %v1113, %v1117
        %v1122 = vadd.f32 %v1094, %v1118
        %v1123 = vadd.f32 %v1095, %v1119
        %v1124 = vadd.f32 %v1096, %v1120
        %v1125 = vadd.f32 %v1097, %v1121
        %vm1126 = vcmp.ge.s32.totalorder %v659, 15
        %vm1127 = vcmp.ge.s32.totalorder %v660, 15
        %vm1128 = vcmp.ge.s32.totalorder %v661, 15
        %vm1129 = vcmp.ge.s32.totalorder %v662, 15
        %v1130 = vsel %vm1126, 1, 0
        %v1131 = vsel %vm1127, 1, 0
        %v1132 = vsel %vm1128, 1, 0
        %v1133 = vsel %vm1129, 1, 0
        %vm1134 = vcmp.eq.s32.totalorder %v1130, 1
        %vm1135 = vcmp.eq.s32.totalorder %v1131, 1
        %vm1136 = vcmp.eq.s32.totalorder %v1132, 1
        %vm1137 = vcmp.eq.s32.totalorder %v1133, 1
        %v1138 = vsel %vm1134, %v898, 0.0
        %v1139 = vsel %vm1135, %v901, 0.0
        %v1140 = vsel %vm1136, %v900, 0.0
        %v1141 = vsel %vm1137, %v899, 0.0
        %v1142 = vlaneseq
        %v1143 = vshrl.u32 %v1142, 7
        %v1144 = vsub.s32 7, %v1143
        %v1145 = vrot.slane %v609, %v1144
        %v1146 = vmul.f32 %v1138, %v1145
        %v1147 = vmul.f32 %v1139, %v1145
        %v1148 = vmul.f32 %v1140, %v1145
        %v1149 = vmul.f32 %v1141, %v1145
        %v1150 = vadd.f32 %v1122, %v1146
        %v1151 = vadd.f32 %v1123, %v1147
        %v1152 = vadd.f32 %v1124, %v1148
        %v1153 = vadd.f32 %v1125, %v1149
        %v1154 = vld [vmem:[%s408] sm:$0x1]
        %v1156 = vlaneseq
        %v1157 = vshrl.u32 %v1156, 7
        %v1158 = vsub.s32 0, %v1157
        %v1159 = vrot.slane %v1154, %v1158
        %v1161 = vmul.f32 %v604, %v1159
        %v1162 = vmul.f32 %v605, %v1159
        %v1163 = vmul.f32 %v606, %v1159
        %v1164 = vmul.f32 %v607, %v1159
        %v1165 = vadd.f32 %v1150, %v1161
        %v1166 = vadd.f32 %v1151, %v1162
        %v1167 = vadd.f32 %v1152, %v1163
        %v1168 = vadd.f32 %v1153, %v1164
        %v1169 = vmul.f32 %v1165, 0.5
        %v1170 = vmul.f32 %v1166, 0.5
        %v1171 = vmul.f32 %v1167, 0.5
        %v1172 = vmul.f32 %v1168, 0.5
        %v1173 = vmul.f32 %v1165, 0.70710677
        %v1174 = vmul.f32 %v1166, 0.70710677
        %v1175 = vmul.f32 %v1167, 0.70710677
        %v1176 = vmul.f32 %v1168, 0.70710677
        %vm1177 = vcmp.ge.f32.partialorder %v1173, 0.0
        %vm1178 = vcmp.ge.f32.partialorder %v1174, 0.0
        %vm1179 = vcmp.ge.f32.partialorder %v1175, 0.0
        %vm1180 = vcmp.ge.f32.partialorder %v1176, 0.0
        %v1181 = vsel %vm1177, 1.0, -1.0
        %v1182 = vsel %vm1178, 1.0, -1.0
        %v1183 = vsel %vm1179, 1.0, -1.0
        %v1184 = vsel %vm1180, 1.0, -1.0
        %v1185 = vand.u32 2147483647, %v1173
        %v1186 = vand.u32 2147483647, %v1174
        %v1187 = vand.u32 2147483647, %v1175
        %v1188 = vand.u32 2147483647, %v1176
        %v1189 = vmul.f32 %v1185, 0.3275911
        %v1190 = vmul.f32 %v1186, 0.3275911
        %v1191 = vmul.f32 %v1187, 0.3275911
        %v1192 = vmul.f32 %v1188, 0.3275911
        %v1193 = vadd.f32 %v1189, 1.0
        %v1194 = vadd.f32 %v1190, 1.0
        %v1195 = vadd.f32 %v1191, 1.0
        %v1196 = vadd.f32 %v1192, 1.0
        %v1197 = vrcp.pop %v1193
        %v1198 = vrcp.pop %v1194
        %v1199 = vrcp.pop %v1195
        %v1200 = vrcp.pop %v1196
        %v1201 = vmul.f32 %v1197, 1.0614054
        %v1202 = vmul.f32 %v1198, 1.0614054
        %v1203 = vmul.f32 %v1199, 1.0614054
        %v1204 = vmul.f32 %v1200, 1.0614054
        %v1205 = vadd.f32 %v1201, -1.4531521
        %v1206 = vadd.f32 %v1202, -1.4531521
        %v1207 = vadd.f32 %v1203, -1.4531521
        %v1208 = vadd.f32 %v1204, -1.4531521
        %v1209 = vmul.f32 %v1205, %v1197
        %v1210 = vmul.f32 %v1206, %v1198
        %v1211 = vmul.f32 %v1207, %v1199
        %v1212 = vmul.f32 %v1208, %v1200
        %v1213 = vadd.f32 %v1209, 1.4214138
        %v1214 = vadd.f32 %v1210, 1.4214138
        %v1215 = vadd.f32 %v1211, 1.4214138
        %v1216 = vadd.f32 %v1212, 1.4214138
        %v1217 = vmul.f32 %v1213, %v1197
        %v1218 = vmul.f32 %v1214, %v1198
        %v1219 = vmul.f32 %v1215, %v1199
        %v1220 = vmul.f32 %v1216, %v1200
        %v1221 = vadd.f32 %v1217, -0.28449672
        %v1222 = vadd.f32 %v1218, -0.28449672
        %v1223 = vadd.f32 %v1219, -0.28449672
        %v1224 = vadd.f32 %v1220, -0.28449672
        %v1225 = vmul.f32 %v1221, %v1197
        %v1226 = vmul.f32 %v1222, %v1198
        %v1227 = vmul.f32 %v1223, %v1199
        %v1228 = vmul.f32 %v1224, %v1200
        %v1229 = vadd.f32 %v1225, 0.2548296
        %v1230 = vadd.f32 %v1226, 0.2548296
        %v1231 = vadd.f32 %v1227, 0.2548296
        %v1232 = vadd.f32 %v1228, 0.2548296
        %v1233 = vmul.f32 %v1229, %v1197
        %v1234 = vmul.f32 %v1230, %v1198
        %v1235 = vmul.f32 %v1231, %v1199
        %v1236 = vmul.f32 %v1232, %v1200
        %v1237 = vsub.f32 0.0, %v1185
        %v1238 = vsub.f32 0.0, %v1186
        %v1239 = vsub.f32 0.0, %v1187
        %v1240 = vsub.f32 0.0, %v1188
        %v1241 = vmul.f32 %v1237, %v1185
        %v1242 = vmul.f32 %v1238, %v1186
        %v1243 = vmul.f32 %v1239, %v1187
        %v1244 = vmul.f32 %v1240, %v1188
        %v1245 = vmul.f32 %v1241, 1.442695
        %v1246 = vpow.pop %v1245
        %v1247 = vmul.f32 %v1242, 1.442695
        %v1248 = vpow.pop %v1247
        %v1249 = vmul.f32 %v1243, 1.442695
        %v1250 = vpow.pop %v1249
        %v1251 = vmul.f32 %v1244, 1.442695
        %v1252 = vpow.pop %v1251
        %v1253 = vmul.f32 %v1233, %v1246
        %v1254 = vmul.f32 %v1234, %v1248
        %v1255 = vmul.f32 %v1235, %v1250
        %v1256 = vmul.f32 %v1236, %v1252
        %v1257 = vsub.f32 1.0, %v1253
        %v1258 = vsub.f32 1.0, %v1254
        %v1259 = vsub.f32 1.0, %v1255
        %v1260 = vsub.f32 1.0, %v1256
        %v1261 = vmul.f32 %v1181, %v1257
        %v1262 = vmul.f32 %v1182, %v1258
        %v1263 = vmul.f32 %v1183, %v1259
        %v1264 = vmul.f32 %v1184, %v1260
        %v1265 = vadd.f32 %v1261, 1.0
        %v1266 = vadd.f32 %v1262, 1.0
        %v1267 = vadd.f32 %v1263, 1.0
        %v1268 = vadd.f32 %v1264, 1.0
        %v1269 = vmul.f32 %v1169, %v1265
        %v1270 = vmul.f32 %v1170, %v1266
        %v1271 = vmul.f32 %v1171, %v1267
        %v1272 = vmul.f32 %v1172, %v1268
        %v1273 = vpack.c.bf16 %v1270, %v1269
        %v1274 = vpack.c.bf16 %v1272, %v1271
        %v1275 = vld [vmem:[%s479] sm:$0xff]
        %v1276 = vld [vmem:[%s479 + $0x8] sm:$0xff]
        %v1277 = vld [vmem:[%s479 + $0x10] sm:$0xff]
        %v1278 = vld [vmem:[%s479 + $0x18] sm:$0xff]
        %v1279 = vld [vmem:[%s479 + $0x20] sm:$0xff]
        %v1280 = vld [vmem:[%s479 + $0x28] sm:$0xff]
        %v1281 = vld [vmem:[%s479 + $0x30] sm:$0xff]
        %v1282 = vld [vmem:[%s479 + $0x38] sm:$0xff]
        %v1283 = vld [vmem:[%s479 + $0x40] sm:$0xff]
        %v1284 = vld [vmem:[%s479 + $0x48] sm:$0xff]
        %v1285 = vld [vmem:[%s479 + $0x50] sm:$0xff]
        %v1286 = vld [vmem:[%s479 + $0x58] sm:$0xff]
        %v1287 = vld [vmem:[%s479 + $0x60] sm:$0xff]
        %v1288 = vld [vmem:[%s479 + $0x68] sm:$0xff]
        %v1289 = vld [vmem:[%s479 + $0x70] sm:$0xff]
        %v1290 = vld [vmem:[%s479 + $0x78] sm:$0xff]
        %v1291 = vld [vmem:[%s483] sm:$0x3]
        %v1293 = vlaneseq
        %v1294 = vshrl.u32 %v1293, 7
        %v1295 = vsub.s32 0, %v1294
        %v1296 = vrot.slane %v1291, %v1295
        %v1297 = vlaneseq
        %v1298 = vshrl.u32 %v1297, 7
        %v1299 = vsub.s32 1, %v1298
        %v1300 = vrot.slane %v1291, %v1299
        %v1319 = vunpack.c.l.b16 %v1275
        %v1320 = vunpack.c.h.b16 %v1275
        %v1321 = vunpack.c.l.b16 %v1276
        %v1322 = vunpack.c.h.b16 %v1276
        %v1323 = vunpack.c.l.b16 %v1277
        %v1324 = vunpack.c.h.b16 %v1277
        %v1325 = vunpack.c.l.b16 %v1278
        %v1326 = vunpack.c.h.b16 %v1278
        %v1327 = vunpack.c.l.b16 %v1279
        %v1328 = vunpack.c.h.b16 %v1279
        %v1329 = vunpack.c.l.b16 %v1280
        %v1330 = vunpack.c.h.b16 %v1280
        %v1331 = vunpack.c.l.b16 %v1281
        %v1332 = vunpack.c.h.b16 %v1281
        %v1333 = vunpack.c.l.b16 %v1282
        %v1334 = vunpack.c.h.b16 %v1282
        %v1335 = vunpack.c.l.b16 %v1283
        %v1336 = vunpack.c.h.b16 %v1283
        %v1337 = vunpack.c.l.b16 %v1284
        %v1338 = vunpack.c.h.b16 %v1284
        %v1339 = vunpack.c.l.b16 %v1285
        %v1340 = vunpack.c.h.b16 %v1285
        %v1341 = vunpack.c.l.b16 %v1286
        %v1342 = vunpack.c.h.b16 %v1286
        %v1343 = vunpack.c.l.b16 %v1287
        %v1344 = vunpack.c.h.b16 %v1287
        %v1345 = vunpack.c.l.b16 %v1288
        %v1346 = vunpack.c.h.b16 %v1288
        %v1347 = vunpack.c.l.b16 %v1289
        %v1348 = vunpack.c.h.b16 %v1289
        %v1349 = vunpack.c.l.b16 %v1290
        %v1350 = vunpack.c.h.b16 %v1290
        %v1351 = vpack.c.b16 %v1321, %v1319
        %v1352 = vpack.c.b16 %v1322, %v1320
        %v1353 = vpack.c.b16 %v1325, %v1323
        %v1354 = vpack.c.b16 %v1326, %v1324
        %v1355 = vpack.c.b16 %v1329, %v1327
        %v1356 = vpack.c.b16 %v1330, %v1328
        %v1357 = vpack.c.b16 %v1333, %v1331
        %v1358 = vpack.c.b16 %v1334, %v1332
        %v1359 = vpack.c.b16 %v1337, %v1335
        %v1360 = vpack.c.b16 %v1338, %v1336
        %v1361 = vpack.c.b16 %v1341, %v1339
        %v1362 = vpack.c.b16 %v1342, %v1340
        %v1363 = vpack.c.b16 %v1345, %v1343
        %v1364 = vpack.c.b16 %v1346, %v1344
        %v1365 = vpack.c.b16 %v1349, %v1347
        %v1366 = vpack.c.b16 %v1350, %v1348
        %1383 = vmatprep.subr.bf16.mxu0 %v1366
        %1384 = vmatpush1.bf16.msra.mxu0 %v1365
        %1385 = vmatprep.subr.bf16.mxu0 %v1364
        %1386 = vmatpush1.bf16.msra.mxu0 %v1363
        %1387 = vmatprep.subr.bf16.mxu0 %v1362
        %1388 = vmatpush1.bf16.msra.mxu0 %v1361
        %1389 = vmatprep.subr.bf16.mxu0 %v1360
        %1390 = vmatpush1.bf16.msra.mxu0 %v1359
        %1391 = vmatprep.subr.bf16.mxu0 %v1358
        %1392 = vmatpush1.bf16.msra.mxu0 %v1357
        %1393 = vmatprep.subr.bf16.mxu0 %v1356
        %1394 = vmatpush1.bf16.msra.mxu0 %v1355
        %1395 = vmatprep.subr.bf16.mxu0 %v1354
        %1396 = vmatpush1.bf16.msra.mxu0 %v1353
        %1397 = vmatprep.subr.bf16.mxu0 %v1352
        %1398 = vmatpush1.bf16.msra.mxu0 %v1351
        %1399 = vmatprep.subr.bf16.mxu0 0
        %1400 = vmatpush2.bf16.msra.mxu0 0
        %1401 = vmatprep.subr.bf16.mxu0 0
        %1402 = vmatpush2.bf16.msra.mxu0 0
        %1403 = vmatprep.subr.bf16.mxu0 0
        %1404 = vmatpush2.bf16.msra.mxu0 0
        %1405 = vmatprep.subr.bf16.mxu0 0
        %1406 = vmatpush2.bf16.msra.mxu0 0
        %1407 = vmatprep.subr.bf16.mxu0 0
        %1408 = vmatpush2.bf16.msra.mxu0 0
        %1409 = vmatprep.subr.bf16.mxu0 0
        %1410 = vmatpush2.bf16.msra.mxu0 0
        %1411 = vmatprep.subr.bf16.mxu0 0
        %1412 = vmatpush2.bf16.msra.mxu0 0
        %1413 = vmatprep.subr.bf16.mxu0 0
        %1414 = vmatpush2.bf16.msra.mxu0 0
        %1415 = vmatprep.mubr.bf16.mxu0 0
        %1416 = vmatmul.mubr.bf16.gmra.mxu0 %v1273
        %v1417 = vpop.f32.mrf.mxu0
        %v1418 = vadd.f32 %v1296, %v1417
        %v1419 = vpop.f32.mrf.mxu0
        %v1420 = vadd.f32 %v1300, %v1419
        %v1421 = vpop.f32.mrf.mxu0
        %v1422 = vadd.f32 %v1296, %v1421
        %v1423 = vpop.f32.mrf.mxu0
        %v1424 = vadd.f32 %v1300, %v1423
        %1425 = vmatprep.mubr.bf16.mxu0 0
        %1426 = vmatmul.mubr.bf16.gmra.mxu0 %v1274
        %v1427 = vpop.f32.mrf.mxu0
        %v1428 = vadd.f32 %v1296, %v1427
        %v1429 = vpop.f32.mrf.mxu0
        %v1430 = vadd.f32 %v1300, %v1429
        %v1431 = vpop.f32.mrf.mxu0
        %v1432 = vadd.f32 %v1296, %v1431
        %v1433 = vpop.f32.mrf.mxu0
        %v1434 = vadd.f32 %v1300, %v1433
        %1435 = vdwg.mxu0
        %v1436 = vxor.u32 %v1420, 2147483648
        %v1437 = vxor.u32 %v1424, 2147483648
        %v1438 = vxor.u32 %v1430, 2147483648
        %v1439 = vxor.u32 %v1434, 2147483648
        %v1440 = vmul.f32 %v1436, 1.442695
        %v1441 = vpow.pop %v1440
        %v1442 = vmul.f32 %v1437, 1.442695
        %v1443 = vpow.pop %v1442
        %v1444 = vmul.f32 %v1438, 1.442695
        %v1445 = vpow.pop %v1444
        %v1446 = vmul.f32 %v1439, 1.442695
        %v1447 = vpow.pop %v1446
        %v1448 = vadd.f32 %v1441, 1.0
        %v1449 = vadd.f32 %v1443, 1.0
        %v1450 = vadd.f32 %v1445, 1.0
        %v1451 = vadd.f32 %v1447, 1.0
        %v1452 = vrcp.pop %v1448
        %v1453 = vmul.f32 1.0, %v1452
        %v1454 = vrcp.pop %v1449
        %v1455 = vmul.f32 1.0, %v1454
        %v1456 = vrcp.pop %v1450
        %v1457 = vmul.f32 1.0, %v1456
        %v1458 = vrcp.pop %v1451
        %v1459 = vmul.f32 1.0, %v1458
        %v1460 = vmul.f32 %v1418, %v1453
        %v1461 = vmul.f32 %v1422, %v1455
        %v1462 = vmul.f32 %v1428, %v1457
        %v1463 = vmul.f32 %v1432, %v1459
        %v1464 = vadd.f32 %v1460, %v604
        %v1465 = vadd.f32 %v1461, %v605
        %v1466 = vadd.f32 %v1462, %v606
        %v1467 = vadd.f32 %v1463, %v607
        %1468 = vadd.xlane.f32.xlu0 %v1464
        %v1469 = vpop.xlane.xlu0 %1468
        %1470 = vadd.xlane.f32.xlu0 %v1465
        %v1471 = vpop.xlane.xlu0 %1470
        %1472 = vadd.xlane.f32.xlu0 %v1466
        %v1473 = vpop.xlane.xlu0 %1472
        %1474 = vadd.xlane.f32.xlu0 %v1467
        %v1475 = vpop.xlane.xlu0 %1474
        %v1476 = vrcp.pop 128.0
        %v1477 = vmul.f32 %v1469, %v1476
        %v1478 = vmul.f32 %v1471, %v1476
        %v1479 = vmul.f32 %v1473, %v1476
        %v1480 = vmul.f32 %v1475, %v1476
        %v1481 = vsub.f32 %v1464, %v1477
        %v1482 = vsub.f32 %v1465, %v1478
        %v1483 = vsub.f32 %v1466, %v1479
        %v1484 = vsub.f32 %v1467, %v1480
        %v1485 = vmul.f32 %v1481, %v1481
        %v1486 = vmul.f32 %v1482, %v1482
        %v1487 = vmul.f32 %v1483, %v1483
        %v1488 = vmul.f32 %v1484, %v1484
        %1489 = vadd.xlane.f32.xlu0 %v1485
        %v1490 = vpop.xlane.xlu0 %1489
        %1491 = vadd.xlane.f32.xlu0 %v1486
        %v1492 = vpop.xlane.xlu0 %1491
        %1493 = vadd.xlane.f32.xlu0 %v1487
        %v1494 = vpop.xlane.xlu0 %1493
        %1495 = vadd.xlane.f32.xlu0 %v1488
        %v1496 = vpop.xlane.xlu0 %1495
        %v1497 = vmul.f32 %v1490, %v1476
        %v1498 = vmul.f32 %v1492, %v1476
        %v1499 = vmul.f32 %v1494, %v1476
        %v1500 = vmul.f32 %v1496, %v1476
        %v1501 = vadd.f32 %v1497, 1e-05
        %v1502 = vadd.f32 %v1498, 1e-05
        %v1503 = vadd.f32 %v1499, 1e-05
        %v1504 = vadd.f32 %v1500, 1e-05
        %v1505 = vrsqrt.pop %v1501
        %v1506 = vrsqrt.pop %v1502
        %v1507 = vrsqrt.pop %v1503
        %v1508 = vrsqrt.pop %v1504
        %v1509 = vmul.f32 %v1481, %v1505
        %v1510 = vmul.f32 %v1482, %v1506
        %v1511 = vmul.f32 %v1483, %v1507
        %v1512 = vmul.f32 %v1484, %v1508
        %v1513 = vld [vmem:[%s416] sm:$0x1]
        %v1515 = vlaneseq
        %v1516 = vshrl.u32 %v1515, 7
        %v1517 = vsub.s32 0, %v1516
        %v1518 = vrot.slane %v1513, %v1517
        %v1520 = vmul.f32 %v1509, %v1518
        %v1521 = vmul.f32 %v1510, %v1518
        %v1522 = vmul.f32 %v1511, %v1518
        %v1523 = vmul.f32 %v1512, %v1518
        %v1524 = vld [vmem:[%s424] sm:$0x1]
        %v1526 = vlaneseq
        %v1527 = vshrl.u32 %v1526, 7
        %v1528 = vsub.s32 0, %v1527
        %v1529 = vrot.slane %v1524, %v1528
        %v1531 = vadd.f32 %v1520, %v1529
        %v1532 = vadd.f32 %v1521, %v1529
        %v1533 = vadd.f32 %v1522, %v1529
        %v1534 = vadd.f32 %v1523, %v1529
        %1535 = vst [vmem:[#allocation2] sm:$0xff] %v1531
        %1536 = vst [vmem:[#allocation2 + $0x8] sm:$0xff] %v1532
        %1537 = vst [vmem:[#allocation2 + $0x10] sm:$0xff] %v1533
        %1538 = vst [vmem:[#allocation2 + $0x18] sm:$0xff] %v1534
        %p1539 = scmp.eq.s32.totalorder %s27, 1
        // Predicated region
        $region81: #{s4_model_forward.1} parent=55 // pred_check
          %p1540 = pneg %p1539
        $region82: #{s4_model_forward.1} parent=55 // pred_check_branch
          %1542 = sbr.rel (%p1540) target = $region84
        $region83: #{s4_model_forward.1} parent=55 // pred_region
          %v1543 = vadd.f32 %v1531, %v1532
          %v1544 = vrot.slane %v1543, 4
          %v1545 = vadd.f32 %v1543, %v1544
          %v1546 = vrot.slane %v1545, 2
          %v1547 = vadd.f32 %v1545, %v1546
          %v1548 = vrot.slane %v1547, 1
          %v1549 = vadd.f32 %v1547, %v1548
          %v1550 = vadd.f32 %v1533, %v1534
          %v1551 = vrot.slane %v1550, 4
          %v1552 = vadd.f32 %v1550, %v1551
          %v1553 = vrot.slane %v1552, 2
          %v1554 = vadd.f32 %v1552, %v1553
          %v1555 = vrot.slane %v1554, 1
          %v1556 = vadd.f32 %v1554, %v1555
          %v1557 = vrcp.pop 16.0
          %v1558 = vmul.f32 %v1549, %v1557
          %v1559 = vmul.f32 %v1556, %v1557
          %vm1562 = vcmask 1041409
          %v1563 = vsel %vm1562, %v1559, %v1558
          %1565 = vst [vmem:[%s9] sm:$0x3] %v1563
        $region84: #{s4_model_forward.1} parent=55 // pred_fallthru
          _
        // Predicated region
        $region85: #{s4_model_forward.1} parent=55 // pred_check
          %p1566 = pneg %p259
        $region86: #{s4_model_forward.1} parent=55 // pred_check_branch
          %1568 = sbr.rel (%p1566) target = $region88
        $region87: #{s4_model_forward.1} parent=55 // pred_region
          _
        $region88: #{s4_model_forward.1} parent=55 // pred_fallthru
          _
        // Predicated region
        $region89: #{s4_model_forward.1} parent=55 // pred_check
          %p1569 = pneg %p259
        $region90: #{s4_model_forward.1} parent=55 // pred_check_branch
          %1571 = sbr.rel (%p1569) target = $region92
        $region91: #{s4_model_forward.1} parent=55 // pred_region
          _
        $region92: #{s4_model_forward.1} parent=55 // pred_fallthru
          _
      $region56: #{s4_model_forward.1} parent=5 // pred_fallthru
        _
      %p1572 = scmp.le.s32.totalorder 2, %s22
      // Predicated region
      $region93: #{s4_model_forward.1} parent=5 // pred_check
        %p1573 = pneg %p1572
      $region94: #{s4_model_forward.1} parent=5 // pred_check_branch
        %1575 = sbr.rel (%p1573) target = $region96
      $region95: #{s4_model_forward.1} parent=5 // pred_region
        %s1576 = ssub.s32 %s22, 2
      $region96: #{s4_model_forward.1} parent=5 // pred_fallthru
        _
    $region6: #{s4_model_forward.1} parent=1 // loop_footer
      %s26 = sadd.s32 1, %s22
    $region7: #{s4_model_forward.1} parent=1 // loop_footer_branch
      %21 = sbr.rel target = $region3
    $region8: #{s4_model_forward.1} parent=1 // loop_exit
      _
    %1577 = vsyncpa [#allocation4], 1
    %s1578 = scalar_lea.sflag [#allocation4], 1
    %1579 = vsyncpa %s1578, 1
    %1580 = vsyncpa [#allocation6], 1
    %s1581 = scalar_lea.sflag [#allocation6], 1
    %1582 = vsyncpa %s1581, 1
    %1583 = vsyncpa [#allocation9], 1
    %s1584 = scalar_lea.sflag [#allocation9], 1
    %1585 = vsyncpa %s1584, 1

</llo_original>
